<compile_context>
chip_gen: v5e
topology: v5e:2x2
jax: 0.10.0
libtpu: 0.0.40
codegen_flags: <defaults>
</compile_context>

<pallas_src>
import functools

import jax
import jax.numpy as jnp
from jax.experimental import pallas as pl
from jax.experimental.pallas import tpu as pltpu


def _relu6(v):
    return jnp.clip(v, 0.0, 6.0)


def _inverted_residual_kernel(*refs, stride, dilation, pad, use_res, expand,
                              strip_h, ew_dtype):
    if expand:
        (x_ref, w1_ref, b1_ref, wd_ref, bd_ref, w2_ref, b2_ref,
         o_ref, pad_scr) = refs
    else:
        (x_ref, wd_ref, bd_ref, w2_ref, b2_ref, o_ref, pad_scr) = refs

    _, H, W, Cin = x_ref.shape
    _, Hout, Wout, Cout = o_ref.shape
    hidden = wd_ref.shape[1]
    d = dilation
    Hp = H + 2 * pad

    # --- 0) zero the top/bottom halo rows of the H-padded scratch ------------
    # Only 2*pad aligned, full-width row strips (no masked column stores: the
    # W border is handled below with roll + column masks).  Done every step
    # (cheap) rather than hoisted to program_id==0, which would be unsafe if
    # the parallel batch axis is sharded across TensorCores.
    zero_rows = jnp.zeros((pad, W, hidden), ew_dtype)
    pad_scr[0:pad, :, :] = zero_rows
    pad_scr[Hp - pad:Hp, :, :] = zero_rows

    # --- 1) pointwise expansion: 1x1 conv (bf16 MXU, f32 acc) + bias + ReLU6 -
    # Written strip-wise straight into the scratch interior; only the H (dim-0)
    # offset changes, so every store is an aligned vst.
    a0 = 0
    while a0 < H:
        ah = min(strip_h, H - a0)
        xs = x_ref[0, a0:a0 + ah, :, :]                       # (ah, W, Cin) f32
        if expand:
            h1 = jnp.dot(xs.reshape(ah * W, Cin).astype(jnp.bfloat16),
                         w1_ref[...],                         # (Cin, hidden) bf16
                         preferred_element_type=jnp.float32)
            h1 = _relu6(h1 + b1_ref[...]).reshape(ah, W, hidden)
        else:
            h1 = xs                                           # hidden == Cin
        pad_scr[pad + a0:pad + a0 + ah, :, :] = h1.astype(ew_dtype)
        a0 += ah

    # Hoisted edge-column masks: the +/-d column shifts are done with
    # pltpu.roll (XLU slot) and the wrapped-around columns are zeroed here.
    col = jax.lax.broadcasted_iota(jnp.int32, (1, W, 1), 1)
    mask_l = (col >= d).astype(jnp.float32)          # valid cols for kx=0 tap
    mask_r = (col < (W - d)).astype(jnp.float32)     # valid cols for kx=2 tap

    wd = wd_ref[...].astype(jnp.float32)             # (9, hidden)
    bd = bd_ref[...]                                 # (1, hidden)
    b2 = b2_ref[...]                                 # (1, oup)
    w2 = w2_ref[...]                                 # (hidden, oup) bf16

    # --- 2+3) depthwise 3x3 + ReLU6 fused with the 1x1 projection ------------
    # Per output-row strip: the f32 accumulator / h2 stay strip-sized and each
    # finished strip feeds the projection matmul and the output store directly.
    r0 = 0
    while r0 < Hout:
        sh = min(strip_h, Hout - r0)
        if stride == 1:
            nrows = sh + 2 * d
            big = pad_scr[r0:r0 + nrows, :, :]                # (nrows, W, hidden)
        else:
            nrows = 2 * sh - 1 + 2 * d
            big = pad_scr[2 * r0:2 * r0 + nrows, :, :]
        bigf = big.astype(jnp.float32)
        big_l = pltpu.roll(bigf, d, axis=1) * mask_l          # reads col - d
        big_r = pltpu.roll(bigf, W - d, axis=1) * mask_r      # reads col + d
        if stride == 2:
            # One even-column deinterleave per kx variant (3 per strip) instead
            # of per-tap strided slices of a full padded buffer.
            bigf = bigf[:, ::2, :]
            big_l = big_l[:, ::2, :]
            big_r = big_r[:, ::2, :]

        acc = None
        for ky in range(3):
            if stride == 1:
                rsl = slice(ky * d, ky * d + sh)
            else:
                rsl = slice(ky * d, ky * d + 2 * sh - 1, 2)
            for kx, src in ((0, big_l), (1, bigf), (2, big_r)):
                tap = src[rsl, :, :]                           # (sh, Wout, hidden)
                k = 3 * ky + kx
                term = tap * wd[k:k + 1, :]
                acc = term if acc is None else acc + term

        h2 = _relu6(acc + bd)                                  # (sh, Wout, hidden) f32
        out = jnp.dot(h2.reshape(sh * Wout, hidden).astype(jnp.bfloat16),
                      w2, preferred_element_type=jnp.float32)
        out = (out + b2).reshape(sh, Wout, Cout)
        if use_res:
            out = out + x_ref[0, r0:r0 + sh, :, :]             # residual in f32
        o_ref[0, r0:r0 + sh, :, :] = out.astype(o_ref.dtype)
        r0 += sh


def _fold_bn(params, expand):
    """Fold BN scale into conv weights; keep biases separate. bf16 MXU weights."""
    folded = {
        "wd": (params["wd"] * params["sd"]).astype(jnp.float32),
        "bd": params["bd"].astype(jnp.float32),
        "w2": (params["w2"] * params["s2"]).astype(jnp.bfloat16),
        "b2": params["b2"].astype(jnp.float32),
    }
    if expand:
        folded["w1"] = (params["w1"] * params["s1"]).astype(jnp.bfloat16)
        folded["b1"] = params["b1"].astype(jnp.float32)
    return folded


def _tpu_generation_config():
    """Chip-aware knobs: elementwise/scratch storage dtype and physical VMEM."""
    vmem_phys = 128 * 1024 * 1024
    try:
        vmem_phys = int(pltpu.get_tpu_info().vmem_capacity_bytes)
    except Exception:
        pass
    kind = ""
    try:
        kind = jax.devices()[0].device_kind.lower()
    except Exception:
        pass
    pre_v6 = any(t in kind for t in ("v2", "v3", "v4", "v5"))
    # bf16 scratch/tap storage on v6e/v7x (halves scratch footprint and tap
    # VMEM traffic); accumulation stays f32 everywhere for accuracy.
    ew_dtype = jnp.float32 if pre_v6 else jnp.bfloat16
    return ew_dtype, vmem_phys


def inverted_residual_nhwc(x_nhwc, folded, *, inp, oup, stride, expand_ratio,
                           dilation=1, strip_h=8):
    """NHWC core (no layout transposes) — use this inside an NHWC network."""
    assert stride in (1, 2)
    hidden = int(round(inp * expand_ratio))
    expand = expand_ratio != 1
    use_res = (stride == 1 and inp == oup)
    pad = 1 if dilation == 1 else dilation

    x = x_nhwc.astype(jnp.float32)
    N, H, W, Cin = x.shape
    assert Cin == inp
    Hout = (H + 2 * pad - dilation * 2 - 1) // stride + 1
    Wout = (W + 2 * pad - dilation * 2 - 1) // stride + 1

    ew_dtype, vmem_phys = _tpu_generation_config()
    strip_h = max(1, min(strip_h, Hout))

    kernel = functools.partial(_inverted_residual_kernel,
                               stride=stride, dilation=dilation, pad=pad,
                               use_res=use_res, expand=expand,
                               strip_h=strip_h, ew_dtype=ew_dtype)

    def full_spec(shape):
        return pl.BlockSpec(shape, lambda n, _s=shape: (0,) * len(_s))

    in_specs = [pl.BlockSpec((1, H, W, Cin), lambda n: (n, 0, 0, 0))]
    args = [x]
    if expand:
        in_specs += [full_spec((Cin, hidden)), full_spec((1, hidden))]
        args += [folded["w1"], folded["b1"]]
    in_specs += [full_spec((9, hidden)), full_spec((1, hidden)),
                 full_spec((hidden, oup)), full_spec((1, oup))]
    args += [folded["wd"], folded["bd"], folded["w2"], folded["b2"]]

    # Advisory cost estimate so XLA can overlap surrounding ops with the kernel.
    flops_img = 2 * Hout * Wout * hidden * (9 + oup)
    if expand:
        flops_img += 2 * H * W * Cin * hidden
    param_bytes = sum(int(v.size) * v.dtype.itemsize for v in args[1:])
    bytes_accessed = int(x.size) * 4 + N * Hout * Wout * oup * 4 + param_bytes
    cost = pl.CostEstimate(flops=N * flops_img, transcendentals=0,
                           bytes_accessed=int(bytes_accessed))

    # Generation-aware scoped-VMEM policy: only raise the limit when the
    # working set needs it, and never above ~3/4 of physical VMEM
    # (~48 MiB on v7x, ~96 MiB on v5e/v6e).
    ew_b = jnp.dtype(ew_dtype).itemsize
    Hp = H + 2 * pad
    scratch_bytes = Hp * W * hidden * ew_b
    block_bytes = 2 * (H * W * Cin + Hout * Wout * oup) * 4
    strip_bytes = 5 * (strip_h + 2 * pad) * W * hidden * 4
    vmem_est = scratch_bytes + block_bytes + 2 * param_bytes + strip_bytes
    cp_kwargs = dict(dimension_semantics=("parallel",))
    if vmem_est > 32 * 1024 * 1024:
        cap = vmem_phys * 3 // 4
        cp_kwargs["vmem_limit_bytes"] = int(min(max(vmem_est * 5 // 4,
                                                    32 * 1024 * 1024), cap))

    out_nhwc = pl.pallas_call(
        kernel,
        out_shape=jax.ShapeDtypeStruct((N, Hout, Wout, oup), jnp.float32),
        grid_spec=pltpu.PrefetchScalarGridSpec(
            num_scalar_prefetch=0,
            grid=(N,),
            in_specs=in_specs,
            out_specs=pl.BlockSpec((1, Hout, Wout, oup),
                                   lambda n: (n, 0, 0, 0)),
            scratch_shapes=[pltpu.VMEM((Hp, W, hidden), ew_dtype)],
        ),
        compiler_params=pltpu.CompilerParams(**cp_kwargs),
        cost_estimate=cost,
    )(*args)
    return out_nhwc


def inverted_residual(x_nchw, params, *, inp, oup, stride, expand_ratio,
                      dilation=1):
    """PyTorch-compatible NCHW wrapper (transposes only at the boundary)."""
    expand = expand_ratio != 1
    folded = _fold_bn(params, expand)
    x = jnp.transpose(x_nchw, (0, 2, 3, 1))                   # NCHW -> NHWC
    y = inverted_residual_nhwc(x, folded, inp=inp, oup=oup, stride=stride,
                               expand_ratio=expand_ratio, dilation=dilation)
    return jnp.transpose(y, (0, 3, 1, 2))                     # NHWC -> NCHW


def make_params(key, inp, oup, expand_ratio, eps=1e-5):
    """Deterministic synthetic weights; BN as (scale, bias) from running stats."""
    hidden = int(round(inp * expand_ratio))
    ks = jax.random.split(key, 6)

    def bn_fold(k, c):
        kg, kb, km, kv = jax.random.split(k, 4)
        gamma = 1.0 + 0.1 * jax.random.normal(kg, (c,), jnp.float32)
        beta = 0.1 * jax.random.normal(kb, (c,), jnp.float32)
        mean = 0.1 * jax.random.normal(km, (c,), jnp.float32)
        var = jax.random.uniform(kv, (c,), jnp.float32, minval=0.5, maxval=1.5)
        scale = gamma * jax.lax.rsqrt(var + eps)
        bias = beta - mean * scale
        return scale[None, :], bias[None, :]

    w1 = jax.random.normal(ks[0], (inp, hidden), jnp.float32) / jnp.sqrt(1.0 * inp)
    wd = jax.random.normal(ks[1], (9, hidden), jnp.float32) / 3.0
    w2 = jax.random.normal(ks[2], (hidden, oup), jnp.float32) / jnp.sqrt(1.0 * hidden)
    s1, b1 = bn_fold(ks[3], hidden)
    sd, bd = bn_fold(ks[4], hidden)
    s2, b2 = bn_fold(ks[5], oup)
    return dict(w1=w1, s1=s1, b1=b1, wd=wd, sd=sd, bd=bd, w2=w2, s2=s2, b2=b2)


def ref_inverted_residual(x_nchw, folded, *, inp, oup, stride, expand_ratio,
                          dilation=1):
    """Plain-JAX reference on the same folded params (f32 convs)."""
    hidden = int(round(inp * expand_ratio))
    expand = expand_ratio != 1
    use_res = (stride == 1 and inp == oup)
    pad = 1 if dilation == 1 else dilation
    dn = ('NHWC', 'HWIO', 'NHWC')
    hp = jax.lax.Precision.HIGHEST

    x = jnp.transpose(x_nchw, (0, 2, 3, 1)).astype(jnp.float32)
    h = x
    if expand:
        w1 = folded['w1'].astype(jnp.float32)[None, None]
        h = jax.lax.conv_general_dilated(h, w1, (1, 1), 'VALID',
                                         dimension_numbers=dn, precision=hp)
        h = jnp.clip(h + folded['b1'], 0.0, 6.0)
    wd = folded['wd'].astype(jnp.float32).reshape(3, 3, hidden)[:, :, None, :]
    h = jax.lax.conv_general_dilated(h, wd, (stride, stride),
                                     [(pad, pad), (pad, pad)],
                                     rhs_dilation=(dilation, dilation),
                                     dimension_numbers=dn,
                                     feature_group_count=hidden, precision=hp)
    h = jnp.clip(h + folded['bd'], 0.0, 6.0)
    w2 = folded['w2'].astype(jnp.float32)[None, None]
    h = jax.lax.conv_general_dilated(h, w2, (1, 1), 'VALID',
                                     dimension_numbers=dn, precision=hp)
    h = h + folded['b2']
    if use_res:
        h = h + x
    return jnp.transpose(h, (0, 3, 1, 2))


if __name__ == "__main__":
    key = jax.random.PRNGKey(0)
    N = 2
    configs = [
        # (inp, oup, stride, expand_ratio, dilation, H, W)
        (4, 4, 1, 6, 1, 16, 16),   # residual block (matches the demo config)
        (4, 8, 2, 6, 1, 16, 16),   # strided block, no residual
        (4, 4, 1, 6, 2, 16, 16),   # dilated block
        (8, 8, 1, 1, 1, 16, 16),   # no expansion, residual
    ]

    for idx, (inp, oup, stride, er, dil, H, W) in enumerate(configs):
        kx, kp, key = jax.random.split(key, 3)
        x = jax.random.normal(kx, (N, inp, H, W), jnp.float32)   # NCHW input
        params = make_params(kp, inp, oup, er)

        out = inverted_residual(x, params, inp=inp, oup=oup, stride=stride,
                                expand_ratio=er, dilation=dil)
        out = jax.block_until_ready(out)

        folded = _fold_bn(params, er != 1)
        ref = ref_inverted_residual(x, folded, inp=inp, oup=oup, stride=stride,
                                    expand_ratio=er, dilation=dil)
        assert out.shape == ref.shape, (idx, out.shape, ref.shape)
        max_err = float(jnp.max(jnp.abs(out - ref)))
        # bf16 MXU inputs + (on v6e/v7x) bf16 tap storage, f32 accumulation.
        assert jnp.allclose(out, ref, atol=6e-2, rtol=6e-2), (idx, max_err)

    print("KERNEL_OK")
</pallas_src>

<mosaic_0001>
module attributes {stable_mosaic.version = 11 : i64} {
  func.func @_inverted_residual_kernel(%arg0: i32, %arg1: memref<1x16x16x4xf32, #tpu.memory_space<vmem>>, %arg2: memref<4x24xbf16, #tpu.memory_space<vmem>>, %arg3: memref<1x24xf32, #tpu.memory_space<vmem>>, %arg4: memref<9x24xf32, #tpu.memory_space<vmem>>, %arg5: memref<1x24xf32, #tpu.memory_space<vmem>>, %arg6: memref<24x4xbf16, #tpu.memory_space<vmem>>, %arg7: memref<1x4xf32, #tpu.memory_space<vmem>>, %arg8: memref<1x16x16x4xf32, #tpu.memory_space<vmem>>, %arg9: memref<18x16x24xbf16, #tpu.memory_space<vmem>>) attributes {dimension_semantics = [#tpu.dimension_semantics<parallel>], iteration_bounds = array<i64: 2>, scalar_prefetch = 0 : i64, scratch_operands = 1 : i64, tpu.core_type = #tpu.core_type<tc>, window_params = [{transform_indices = @transform_0, window_bounds = array<i64: 1, 16, 16, 4>}, {pipeline_mode = #tpu.pipeline_mode<synchronous>, transform_indices = @transform_1, window_bounds = array<i64: 4, 24>}, {pipeline_mode = #tpu.pipeline_mode<synchronous>, transform_indices = @transform_2, window_bounds = array<i64: 1, 24>}, {pipeline_mode = #tpu.pipeline_mode<synchronous>, transform_indices = @transform_3, window_bounds = array<i64: 9, 24>}, {pipeline_mode = #tpu.pipeline_mode<synchronous>, transform_indices = @transform_4, window_bounds = array<i64: 1, 24>}, {pipeline_mode = #tpu.pipeline_mode<synchronous>, transform_indices = @transform_5, window_bounds = array<i64: 24, 4>}, {pipeline_mode = #tpu.pipeline_mode<synchronous>, transform_indices = @transform_6, window_bounds = array<i64: 1, 4>}, {transform_indices = @transform_7, window_bounds = array<i64: 1, 16, 16, 4>}]} {
    %cst = arith.constant 0.000000e+00 : bf16
    %0 = vector.broadcast %cst : bf16 to vector<1x16x24xbf16>
    %c0 = arith.constant 0 : index
    %c0_0 = arith.constant 0 : index
    %c0_1 = arith.constant 0 : index
    %1 = vector.load %arg9[%c0, %c0_0, %c0_1] : memref<18x16x24xbf16, #tpu.memory_space<vmem>>, vector<1x16x24xbf16>
    tpu.vector_store %arg9[%c0, %c0_0, %c0_1], %0 {strides = array<i32>} : memref<18x16x24xbf16, #tpu.memory_space<vmem>>, vector<1x16x24xbf16>,
    %c17 = arith.constant 17 : index
    %c0_2 = arith.constant 0 : index
    %c0_3 = arith.constant 0 : index
    %2 = vector.load %arg9[%c17, %c0_2, %c0_3] : memref<18x16x24xbf16, #tpu.memory_space<vmem>>, vector<1x16x24xbf16>
    tpu.vector_store %arg9[%c17, %c0_2, %c0_3], %0 {strides = array<i32>} : memref<18x16x24xbf16, #tpu.memory_space<vmem>>, vector<1x16x24xbf16>,
    %c0_4 = arith.constant 0 : index
    %c0_5 = arith.constant 0 : index
    %c0_6 = arith.constant 0 : index
    %c0_7 = arith.constant 0 : index
    %3 = vector.load %arg1[%c0_4, %c0_5, %c0_6, %c0_7] : memref<1x16x16x4xf32, #tpu.memory_space<vmem>>, vector<1x8x16x4xf32>
    %4 = vector.shape_cast %3 : vector<1x8x16x4xf32> to vector<8x16x4xf32>
    %5 = vector.shape_cast %4 : vector<8x16x4xf32> to vector<128x4xf32>
    %6 = arith.truncf %5 : vector<128x4xf32> to vector<128x4xbf16>
    %c0_8 = arith.constant 0 : index
    %c0_9 = arith.constant 0 : index
    %7 = vector.load %arg2[%c0_8, %c0_9] : memref<4x24xbf16, #tpu.memory_space<vmem>>, vector<4x24xbf16>
    %cst_10 = arith.constant dense<0.000000e+00> : vector<128x24xf32>
    %8 = tpu.matmul %6, %7, %cst_10 {dimension_numbers = #tpu.dot_dimension_numbers<[1], [0], [0], [1], [0, 0, 1, 1], [], []>} : vector<128x4xbf16>, vector<4x24xbf16>, vector<128x24xf32> -> vector<128x24xf32>
    %c0_11 = arith.constant 0 : index
    %c0_12 = arith.constant 0 : index
    %9 = vector.load %arg3[%c0_11, %c0_12] : memref<1x24xf32, #tpu.memory_space<vmem>>, vector<1x24xf32>
    %10 = vector.broadcast %9 : vector<1x24xf32> to vector<128x24xf32>
    %11 = arith.addf %8, %10 : vector<128x24xf32>
    %cst_13 = arith.constant 0.000000e+00 : f32
    %cst_14 = arith.constant 6.000000e+00 : f32
    %12 = vector.broadcast %cst_13 : f32 to vector<128x24xf32>
    %13 = arith.maximumf %12, %11 : vector<128x24xf32>
    %14 = vector.broadcast %cst_14 : f32 to vector<128x24xf32>
    %15 = arith.minimumf %14, %13 : vector<128x24xf32>
    %16 = vector.shape_cast %15 : vector<128x24xf32> to vector<8x16x24xf32>
    %17 = arith.truncf %16 : vector<8x16x24xf32> to vector<8x16x24xbf16>
    %c1 = arith.constant 1 : index
    %c0_15 = arith.constant 0 : index
    %c0_16 = arith.constant 0 : index
    %18 = vector.load %arg9[%c1, %c0_15, %c0_16] : memref<18x16x24xbf16, #tpu.memory_space<vmem>>, vector<8x16x24xbf16>
    tpu.vector_store %arg9[%c1, %c0_15, %c0_16], %17 {strides = array<i32>} : memref<18x16x24xbf16, #tpu.memory_space<vmem>>, vector<8x16x24xbf16>,
    %c0_17 = arith.constant 0 : index
    %c8 = arith.constant 8 : index
    %c0_18 = arith.constant 0 : index
    %c0_19 = arith.constant 0 : index
    %19 = vector.load %arg1[%c0_17, %c8, %c0_18, %c0_19] : memref<1x16x16x4xf32, #tpu.memory_space<vmem>>, vector<1x8x16x4xf32>
    %20 = vector.shape_cast %19 : vector<1x8x16x4xf32> to vector<8x16x4xf32>
    %21 = vector.shape_cast %20 : vector<8x16x4xf32> to vector<128x4xf32>
    %22 = arith.truncf %21 : vector<128x4xf32> to vector<128x4xbf16>
    %c0_20 = arith.constant 0 : index
    %c0_21 = arith.constant 0 : index
    %23 = vector.load %arg2[%c0_20, %c0_21] : memref<4x24xbf16, #tpu.memory_space<vmem>>, vector<4x24xbf16>
    %cst_22 = arith.constant dense<0.000000e+00> : vector<128x24xf32>
    %24 = tpu.matmul %22, %23, %cst_22 {dimension_numbers = #tpu.dot_dimension_numbers<[1], [0], [0], [1], [0, 0, 1, 1], [], []>} : vector<128x4xbf16>, vector<4x24xbf16>, vector<128x24xf32> -> vector<128x24xf32>
    %c0_23 = arith.constant 0 : index
    %c0_24 = arith.constant 0 : index
    %25 = vector.load %arg3[%c0_23, %c0_24] : memref<1x24xf32, #tpu.memory_space<vmem>>, vector<1x24xf32>
    %26 = vector.broadcast %25 : vector<1x24xf32> to vector<128x24xf32>
    %27 = arith.addf %24, %26 : vector<128x24xf32>
    %cst_25 = arith.constant 0.000000e+00 : f32
    %cst_26 = arith.constant 6.000000e+00 : f32
    %28 = vector.broadcast %cst_25 : f32 to vector<128x24xf32>
    %29 = arith.maximumf %28, %27 : vector<128x24xf32>
    %30 = vector.broadcast %cst_26 : f32 to vector<128x24xf32>
    %31 = arith.minimumf %30, %29 : vector<128x24xf32>
    %32 = vector.shape_cast %31 : vector<128x24xf32> to vector<8x16x24xf32>
    %33 = arith.truncf %32 : vector<8x16x24xf32> to vector<8x16x24xbf16>
    %c9 = arith.constant 9 : index
    %c0_27 = arith.constant 0 : index
    %c0_28 = arith.constant 0 : index
    %34 = vector.load %arg9[%c9, %c0_27, %c0_28] : memref<18x16x24xbf16, #tpu.memory_space<vmem>>, vector<8x16x24xbf16>
    tpu.vector_store %arg9[%c9, %c0_27, %c0_28], %33 {strides = array<i32>} : memref<18x16x24xbf16, #tpu.memory_space<vmem>>, vector<8x16x24xbf16>,
    %35 = tpu.iota {dimensions = array<i32: 1>} : vector<1x16x1xi32>
    %c1_i32 = arith.constant 1 : i32
    %36 = vector.broadcast %c1_i32 : i32 to vector<1x16x1xi32>
    %37 = arith.cmpi sge, %35, %36 : vector<1x16x1xi32>
    %38 = arith.extui %37 : vector<1x16x1xi1> to vector<1x16x1xi32>
    %39 = arith.sitofp %38 : vector<1x16x1xi32> to vector<1x16x1xf32>
    %c15_i32 = arith.constant 15 : i32
    %40 = vector.broadcast %c15_i32 : i32 to vector<1x16x1xi32>
    %41 = arith.cmpi slt, %35, %40 : vector<1x16x1xi32>
    %42 = arith.extui %41 : vector<1x16x1xi1> to vector<1x16x1xi32>
    %43 = arith.sitofp %42 : vector<1x16x1xi32> to vector<1x16x1xf32>
    %c0_29 = arith.constant 0 : index
    %c0_30 = arith.constant 0 : index
    %44 = vector.load %arg4[%c0_29, %c0_30] : memref<9x24xf32, #tpu.memory_space<vmem>>, vector<9x24xf32>
    %c0_31 = arith.constant 0 : index
    %c0_32 = arith.constant 0 : index
    %45 = vector.load %arg5[%c0_31, %c0_32] : memref<1x24xf32, #tpu.memory_space<vmem>>, vector<1x24xf32>
    %c0_33 = arith.constant 0 : index
    %c0_34 = arith.constant 0 : index
    %46 = vector.load %arg7[%c0_33, %c0_34] : memref<1x4xf32, #tpu.memory_space<vmem>>, vector<1x4xf32>
    %c0_35 = arith.constant 0 : index
    %c0_36 = arith.constant 0 : index
    %47 = vector.load %arg6[%c0_35, %c0_36] : memref<24x4xbf16, #tpu.memory_space<vmem>>, vector<24x4xbf16>
    %c0_37 = arith.constant 0 : index
    %c0_38 = arith.constant 0 : index
    %c0_39 = arith.constant 0 : index
    %48 = vector.load %arg9[%c0_37, %c0_38, %c0_39] : memref<18x16x24xbf16, #tpu.memory_space<vmem>>, vector<10x16x24xbf16>
    %49 = arith.extf %48 : vector<10x16x24xbf16> to vector<10x16x24xf32>
    %c1_i32_40 = arith.constant 1 : i32
    %50 = tpu.dynamic_rotate %49 by %c1_i32_40 dim 1 : vector<10x16x24xf32>, i32 -> vector<10x16x24xf32>
    %51 = vector.broadcast %39 : vector<1x16x1xf32> to vector<10x16x24xf32>
    %52 = arith.mulf %50, %51 : vector<10x16x24xf32>
    %c15_i32_41 = arith.constant 15 : i32
    %53 = tpu.dynamic_rotate %49 by %c15_i32_41 dim 1 : vector<10x16x24xf32>, i32 -> vector<10x16x24xf32>
    %54 = vector.broadcast %43 : vector<1x16x1xf32> to vector<10x16x24xf32>
    %55 = arith.mulf %53, %54 : vector<10x16x24xf32>
    %56 = vector.extract_strided_slice %52 {offsets = [0, 0, 0], sizes = [8, 16, 24], strides = [1, 1, 1]} : vector<10x16x24xf32> to vector<8x16x24xf32>
    %57 = vector.extract_strided_slice %44 {offsets = [0, 0], sizes = [1, 24], strides = [1, 1]} : vector<9x24xf32> to vector<1x24xf32>
    %58 = vector.shape_cast %57 : vector<1x24xf32> to vector<1x1x24xf32>
    %59 = vector.broadcast %58 : vector<1x1x24xf32> to vector<8x16x24xf32>
    %60 = arith.mulf %56, %59 : vector<8x16x24xf32>
    %61 = vector.extract_strided_slice %49 {offsets = [0, 0, 0], sizes = [8, 16, 24], strides = [1, 1, 1]} : vector<10x16x24xf32> to vector<8x16x24xf32>
    %62 = vector.extract_strided_slice %44 {offsets = [1, 0], sizes = [1, 24], strides = [1, 1]} : vector<9x24xf32> to vector<1x24xf32>
    %63 = vector.shape_cast %62 : vector<1x24xf32> to vector<1x1x24xf32>
    %64 = vector.broadcast %63 : vector<1x1x24xf32> to vector<8x16x24xf32>
    %65 = arith.mulf %61, %64 : vector<8x16x24xf32>
    %66 = arith.addf %60, %65 : vector<8x16x24xf32>
    %67 = vector.extract_strided_slice %55 {offsets = [0, 0, 0], sizes = [8, 16, 24], strides = [1, 1, 1]} : vector<10x16x24xf32> to vector<8x16x24xf32>
    %68 = vector.extract_strided_slice %44 {offsets = [2, 0], sizes = [1, 24], strides = [1, 1]} : vector<9x24xf32> to vector<1x24xf32>
    %69 = vector.shape_cast %68 : vector<1x24xf32> to vector<1x1x24xf32>
    %70 = vector.broadcast %69 : vector<1x1x24xf32> to vector<8x16x24xf32>
    %71 = arith.mulf %67, %70 : vector<8x16x24xf32>
    %72 = arith.addf %66, %71 : vector<8x16x24xf32>
    %73 = vector.extract_strided_slice %52 {offsets = [1, 0, 0], sizes = [8, 16, 24], strides = [1, 1, 1]} : vector<10x16x24xf32> to vector<8x16x24xf32>
    %74 = vector.extract_strided_slice %44 {offsets = [3, 0], sizes = [1, 24], strides = [1, 1]} : vector<9x24xf32> to vector<1x24xf32>
    %75 = vector.shape_cast %74 : vector<1x24xf32> to vector<1x1x24xf32>
    %76 = vector.broadcast %75 : vector<1x1x24xf32> to vector<8x16x24xf32>
    %77 = arith.mulf %73, %76 : vector<8x16x24xf32>
    %78 = arith.addf %72, %77 : vector<8x16x24xf32>
    %79 = vector.extract_strided_slice %49 {offsets = [1, 0, 0], sizes = [8, 16, 24], strides = [1, 1, 1]} : vector<10x16x24xf32> to vector<8x16x24xf32>
    %80 = vector.extract_strided_slice %44 {offsets = [4, 0], sizes = [1, 24], strides = [1, 1]} : vector<9x24xf32> to vector<1x24xf32>
    %81 = vector.shape_cast %80 : vector<1x24xf32> to vector<1x1x24xf32>
    %82 = vector.broadcast %81 : vector<1x1x24xf32> to vector<8x16x24xf32>
    %83 = arith.mulf %79, %82 : vector<8x16x24xf32>
    %84 = arith.addf %78, %83 : vector<8x16x24xf32>
    %85 = vector.extract_strided_slice %55 {offsets = [1, 0, 0], sizes = [8, 16, 24], strides = [1, 1, 1]} : vector<10x16x24xf32> to vector<8x16x24xf32>
    %86 = vector.extract_strided_slice %44 {offsets = [5, 0], sizes = [1, 24], strides = [1, 1]} : vector<9x24xf32> to vector<1x24xf32>
    %87 = vector.shape_cast %86 : vector<1x24xf32> to vector<1x1x24xf32>
    %88 = vector.broadcast %87 : vector<1x1x24xf32> to vector<8x16x24xf32>
    %89 = arith.mulf %85, %88 : vector<8x16x24xf32>
    %90 = arith.addf %84, %89 : vector<8x16x24xf32>
    %91 = vector.extract_strided_slice %52 {offsets = [2, 0, 0], sizes = [8, 16, 24], strides = [1, 1, 1]} : vector<10x16x24xf32> to vector<8x16x24xf32>
    %92 = vector.extract_strided_slice %44 {offsets = [6, 0], sizes = [1, 24], strides = [1, 1]} : vector<9x24xf32> to vector<1x24xf32>
    %93 = vector.shape_cast %92 : vector<1x24xf32> to vector<1x1x24xf32>
    %94 = vector.broadcast %93 : vector<1x1x24xf32> to vector<8x16x24xf32>
    %95 = arith.mulf %91, %94 : vector<8x16x24xf32>
    %96 = arith.addf %90, %95 : vector<8x16x24xf32>
    %97 = vector.extract_strided_slice %49 {offsets = [2, 0, 0], sizes = [8, 16, 24], strides = [1, 1, 1]} : vector<10x16x24xf32> to vector<8x16x24xf32>
    %98 = vector.extract_strided_slice %44 {offsets = [7, 0], sizes = [1, 24], strides = [1, 1]} : vector<9x24xf32> to vector<1x24xf32>
    %99 = vector.shape_cast %98 : vector<1x24xf32> to vector<1x1x24xf32>
    %100 = vector.broadcast %99 : vector<1x1x24xf32> to vector<8x16x24xf32>
    %101 = arith.mulf %97, %100 : vector<8x16x24xf32>
    %102 = arith.addf %96, %101 : vector<8x16x24xf32>
    %103 = vector.extract_strided_slice %55 {offsets = [2, 0, 0], sizes = [8, 16, 24], strides = [1, 1, 1]} : vector<10x16x24xf32> to vector<8x16x24xf32>
    %104 = vector.extract_strided_slice %44 {offsets = [8, 0], sizes = [1, 24], strides = [1, 1]} : vector<9x24xf32> to vector<1x24xf32>
    %105 = vector.shape_cast %104 : vector<1x24xf32> to vector<1x1x24xf32>
    %106 = vector.broadcast %105 : vector<1x1x24xf32> to vector<8x16x24xf32>
    %107 = arith.mulf %103, %106 : vector<8x16x24xf32>
    %108 = arith.addf %102, %107 : vector<8x16x24xf32>
    %109 = vector.shape_cast %45 : vector<1x24xf32> to vector<1x1x24xf32>
    %110 = vector.broadcast %109 : vector<1x1x24xf32> to vector<8x16x24xf32>
    %111 = arith.addf %108, %110 : vector<8x16x24xf32>
    %cst_42 = arith.constant 0.000000e+00 : f32
    %cst_43 = arith.constant 6.000000e+00 : f32
    %112 = vector.broadcast %cst_42 : f32 to vector<8x16x24xf32>
    %113 = arith.maximumf %112, %111 : vector<8x16x24xf32>
    %114 = vector.broadcast %cst_43 : f32 to vector<8x16x24xf32>
    %115 = arith.minimumf %114, %113 : vector<8x16x24xf32>
    %116 = vector.shape_cast %115 : vector<8x16x24xf32> to vector<128x24xf32>
    %117 = arith.truncf %116 : vector<128x24xf32> to vector<128x24xbf16>
    %cst_44 = arith.constant dense<0.000000e+00> : vector<128x4xf32>
    %118 = tpu.matmul %117, %47, %cst_44 {dimension_numbers = #tpu.dot_dimension_numbers<[1], [0], [0], [1], [0, 0, 1, 1], [], []>} : vector<128x24xbf16>, vector<24x4xbf16>, vector<128x4xf32> -> vector<128x4xf32>
    %119 = vector.broadcast %46 : vector<1x4xf32> to vector<128x4xf32>
    %120 = arith.addf %118, %119 : vector<128x4xf32>
    %121 = vector.shape_cast %120 : vector<128x4xf32> to vector<8x16x4xf32>
    %c0_45 = arith.constant 0 : index
    %c0_46 = arith.constant 0 : index
    %c0_47 = arith.constant 0 : index
    %c0_48 = arith.constant 0 : index
    %122 = vector.load %arg1[%c0_45, %c0_46, %c0_47, %c0_48] : memref<1x16x16x4xf32, #tpu.memory_space<vmem>>, vector<1x8x16x4xf32>
    %123 = vector.shape_cast %122 : vector<1x8x16x4xf32> to vector<8x16x4xf32>
    %124 = arith.addf %121, %123 : vector<8x16x4xf32>
    %c0_49 = arith.constant 0 : index
    %c0_50 = arith.constant 0 : index
    %c0_51 = arith.constant 0 : index
    %c0_52 = arith.constant 0 : index
    %125 = vector.load %arg8[%c0_49, %c0_50, %c0_51, %c0_52] : memref<1x16x16x4xf32, #tpu.memory_space<vmem>>, vector<1x8x16x4xf32>
    %126 = vector.shape_cast %125 : vector<1x8x16x4xf32> to vector<8x16x4xf32>
    %127 = vector.shape_cast %124 : vector<8x16x4xf32> to vector<1x8x16x4xf32>
    tpu.vector_store %arg8[%c0_49, %c0_50, %c0_51, %c0_52], %127 {strides = array<i32>} : memref<1x16x16x4xf32, #tpu.memory_space<vmem>>, vector<1x8x16x4xf32>,
    %c8_53 = arith.constant 8 : index
    %c0_54 = arith.constant 0 : index
    %c0_55 = arith.constant 0 : index
    %128 = vector.load %arg9[%c8_53, %c0_54, %c0_55] : memref<18x16x24xbf16, #tpu.memory_space<vmem>>, vector<10x16x24xbf16>
    %129 = arith.extf %128 : vector<10x16x24xbf16> to vector<10x16x24xf32>
    %c1_i32_56 = arith.constant 1 : i32
    %130 = tpu.dynamic_rotate %129 by %c1_i32_56 dim 1 : vector<10x16x24xf32>, i32 -> vector<10x16x24xf32>
    %131 = vector.broadcast %39 : vector<1x16x1xf32> to vector<10x16x24xf32>
    %132 = arith.mulf %130, %131 : vector<10x16x24xf32>
    %c15_i32_57 = arith.constant 15 : i32
    %133 = tpu.dynamic_rotate %129 by %c15_i32_57 dim 1 : vector<10x16x24xf32>, i32 -> vector<10x16x24xf32>
    %134 = vector.broadcast %43 : vector<1x16x1xf32> to vector<10x16x24xf32>
    %135 = arith.mulf %133, %134 : vector<10x16x24xf32>
    %136 = vector.extract_strided_slice %132 {offsets = [0, 0, 0], sizes = [8, 16, 24], strides = [1, 1, 1]} : vector<10x16x24xf32> to vector<8x16x24xf32>
    %137 = vector.extract_strided_slice %44 {offsets = [0, 0], sizes = [1, 24], strides = [1, 1]} : vector<9x24xf32> to vector<1x24xf32>
    %138 = vector.shape_cast %137 : vector<1x24xf32> to vector<1x1x24xf32>
    %139 = vector.broadcast %138 : vector<1x1x24xf32> to vector<8x16x24xf32>
    %140 = arith.mulf %136, %139 : vector<8x16x24xf32>
    %141 = vector.extract_strided_slice %129 {offsets = [0, 0, 0], sizes = [8, 16, 24], strides = [1, 1, 1]} : vector<10x16x24xf32> to vector<8x16x24xf32>
    %142 = vector.extract_strided_slice %44 {offsets = [1, 0], sizes = [1, 24], strides = [1, 1]} : vector<9x24xf32> to vector<1x24xf32>
    %143 = vector.shape_cast %142 : vector<1x24xf32> to vector<1x1x24xf32>
    %144 = vector.broadcast %143 : vector<1x1x24xf32> to vector<8x16x24xf32>
    %145 = arith.mulf %141, %144 : vector<8x16x24xf32>
    %146 = arith.addf %140, %145 : vector<8x16x24xf32>
    %147 = vector.extract_strided_slice %135 {offsets = [0, 0, 0], sizes = [8, 16, 24], strides = [1, 1, 1]} : vector<10x16x24xf32> to vector<8x16x24xf32>
    %148 = vector.extract_strided_slice %44 {offsets = [2, 0], sizes = [1, 24], strides = [1, 1]} : vector<9x24xf32> to vector<1x24xf32>
    %149 = vector.shape_cast %148 : vector<1x24xf32> to vector<1x1x24xf32>
    %150 = vector.broadcast %149 : vector<1x1x24xf32> to vector<8x16x24xf32>
    %151 = arith.mulf %147, %150 : vector<8x16x24xf32>
    %152 = arith.addf %146, %151 : vector<8x16x24xf32>
    %153 = vector.extract_strided_slice %132 {offsets = [1, 0, 0], sizes = [8, 16, 24], strides = [1, 1, 1]} : vector<10x16x24xf32> to vector<8x16x24xf32>
    %154 = vector.extract_strided_slice %44 {offsets = [3, 0], sizes = [1, 24], strides = [1, 1]} : vector<9x24xf32> to vector<1x24xf32>
    %155 = vector.shape_cast %154 : vector<1x24xf32> to vector<1x1x24xf32>
    %156 = vector.broadcast %155 : vector<1x1x24xf32> to vector<8x16x24xf32>
    %157 = arith.mulf %153, %156 : vector<8x16x24xf32>
    %158 = arith.addf %152, %157 : vector<8x16x24xf32>
    %159 = vector.extract_strided_slice %129 {offsets = [1, 0, 0], sizes = [8, 16, 24], strides = [1, 1, 1]} : vector<10x16x24xf32> to vector<8x16x24xf32>
    %160 = vector.extract_strided_slice %44 {offsets = [4, 0], sizes = [1, 24], strides = [1, 1]} : vector<9x24xf32> to vector<1x24xf32>
    %161 = vector.shape_cast %160 : vector<1x24xf32> to vector<1x1x24xf32>
    %162 = vector.broadcast %161 : vector<1x1x24xf32> to vector<8x16x24xf32>
    %163 = arith.mulf %159, %162 : vector<8x16x24xf32>
    %164 = arith.addf %158, %163 : vector<8x16x24xf32>
    %165 = vector.extract_strided_slice %135 {offsets = [1, 0, 0], sizes = [8, 16, 24], strides = [1, 1, 1]} : vector<10x16x24xf32> to vector<8x16x24xf32>
    %166 = vector.extract_strided_slice %44 {offsets = [5, 0], sizes = [1, 24], strides = [1, 1]} : vector<9x24xf32> to vector<1x24xf32>
    %167 = vector.shape_cast %166 : vector<1x24xf32> to vector<1x1x24xf32>
    %168 = vector.broadcast %167 : vector<1x1x24xf32> to vector<8x16x24xf32>
    %169 = arith.mulf %165, %168 : vector<8x16x24xf32>
    %170 = arith.addf %164, %169 : vector<8x16x24xf32>
    %171 = vector.extract_strided_slice %132 {offsets = [2, 0, 0], sizes = [8, 16, 24], strides = [1, 1, 1]} : vector<10x16x24xf32> to vector<8x16x24xf32>
    %172 = vector.extract_strided_slice %44 {offsets = [6, 0], sizes = [1, 24], strides = [1, 1]} : vector<9x24xf32> to vector<1x24xf32>
    %173 = vector.shape_cast %172 : vector<1x24xf32> to vector<1x1x24xf32>
    %174 = vector.broadcast %173 : vector<1x1x24xf32> to vector<8x16x24xf32>
    %175 = arith.mulf %171, %174 : vector<8x16x24xf32>
    %176 = arith.addf %170, %175 : vector<8x16x24xf32>
    %177 = vector.extract_strided_slice %129 {offsets = [2, 0, 0], sizes = [8, 16, 24], strides = [1, 1, 1]} : vector<10x16x24xf32> to vector<8x16x24xf32>
    %178 = vector.extract_strided_slice %44 {offsets = [7, 0], sizes = [1, 24], strides = [1, 1]} : vector<9x24xf32> to vector<1x24xf32>
    %179 = vector.shape_cast %178 : vector<1x24xf32> to vector<1x1x24xf32>
    %180 = vector.broadcast %179 : vector<1x1x24xf32> to vector<8x16x24xf32>
    %181 = arith.mulf %177, %180 : vector<8x16x24xf32>
    %182 = arith.addf %176, %181 : vector<8x16x24xf32>
    %183 = vector.extract_strided_slice %135 {offsets = [2, 0, 0], sizes = [8, 16, 24], strides = [1, 1, 1]} : vector<10x16x24xf32> to vector<8x16x24xf32>
    %184 = vector.extract_strided_slice %44 {offsets = [8, 0], sizes = [1, 24], strides = [1, 1]} : vector<9x24xf32> to vector<1x24xf32>
    %185 = vector.shape_cast %184 : vector<1x24xf32> to vector<1x1x24xf32>
    %186 = vector.broadcast %185 : vector<1x1x24xf32> to vector<8x16x24xf32>
    %187 = arith.mulf %183, %186 : vector<8x16x24xf32>
    %188 = arith.addf %182, %187 : vector<8x16x24xf32>
    %189 = vector.shape_cast %45 : vector<1x24xf32> to vector<1x1x24xf32>
    %190 = vector.broadcast %189 : vector<1x1x24xf32> to vector<8x16x24xf32>
    %191 = arith.addf %188, %190 : vector<8x16x24xf32>
    %cst_58 = arith.constant 0.000000e+00 : f32
    %cst_59 = arith.constant 6.000000e+00 : f32
    %192 = vector.broadcast %cst_58 : f32 to vector<8x16x24xf32>
    %193 = arith.maximumf %192, %191 : vector<8x16x24xf32>
    %194 = vector.broadcast %cst_59 : f32 to vector<8x16x24xf32>
    %195 = arith.minimumf %194, %193 : vector<8x16x24xf32>
    %196 = vector.shape_cast %195 : vector<8x16x24xf32> to vector<128x24xf32>
    %197 = arith.truncf %196 : vector<128x24xf32> to vector<128x24xbf16>
    %cst_60 = arith.constant dense<0.000000e+00> : vector<128x4xf32>
    %198 = tpu.matmul %197, %47, %cst_60 {dimension_numbers = #tpu.dot_dimension_numbers<[1], [0], [0], [1], [0, 0, 1, 1], [], []>} : vector<128x24xbf16>, vector<24x4xbf16>, vector<128x4xf32> -> vector<128x4xf32>
    %199 = vector.broadcast %46 : vector<1x4xf32> to vector<128x4xf32>
    %200 = arith.addf %198, %199 : vector<128x4xf32>
    %201 = vector.shape_cast %200 : vector<128x4xf32> to vector<8x16x4xf32>
    %c0_61 = arith.constant 0 : index
    %c8_62 = arith.constant 8 : index
    %c0_63 = arith.constant 0 : index
    %c0_64 = arith.constant 0 : index
    %202 = vector.load %arg1[%c0_61, %c8_62, %c0_63, %c0_64] : memref<1x16x16x4xf32, #tpu.memory_space<vmem>>, vector<1x8x16x4xf32>
    %203 = vector.shape_cast %202 : vector<1x8x16x4xf32> to vector<8x16x4xf32>
    %204 = arith.addf %201, %203 : vector<8x16x4xf32>
    %c0_65 = arith.constant 0 : index
    %c8_66 = arith.constant 8 : index
    %c0_67 = arith.constant 0 : index
    %c0_68 = arith.constant 0 : index
    %205 = vector.load %arg8[%c0_65, %c8_66, %c0_67, %c0_68] : memref<1x16x16x4xf32, #tpu.memory_space<vmem>>, vector<1x8x16x4xf32>
    %206 = vector.shape_cast %205 : vector<1x8x16x4xf32> to vector<8x16x4xf32>
    %207 = vector.shape_cast %204 : vector<8x16x4xf32> to vector<1x8x16x4xf32>
    tpu.vector_store %arg8[%c0_65, %c8_66, %c0_67, %c0_68], %207 {strides = array<i32>} : memref<1x16x16x4xf32, #tpu.memory_space<vmem>>, vector<1x8x16x4xf32>,
    return
  }
  func.func @transform_0(%arg0: i32) -> (i32, i32, i32, i32) {
    %c0_i32 = arith.constant 0 : i32
    %c0_i32_0 = arith.constant 0 : i32
    %c0_i32_1 = arith.constant 0 : i32
    %c0_i32_2 = arith.constant 0 : i32
    return %arg0, %c0_i32, %c0_i32_0, %c0_i32_1 : i32, i32, i32, i32
  }
  func.func @transform_1(%arg0: i32) -> (i32, i32) {
    %c0_i32 = arith.constant 0 : i32
    %c0_i32_0 = arith.constant 0 : i32
    %c0_i32_1 = arith.constant 0 : i32
    return %c0_i32, %c0_i32_0 : i32, i32
  }
  func.func @transform_2(%arg0: i32) -> (i32, i32) {
    %c0_i32 = arith.constant 0 : i32
    %c0_i32_0 = arith.constant 0 : i32
    %c0_i32_1 = arith.constant 0 : i32
    return %c0_i32, %c0_i32_0 : i32, i32
  }
  func.func @transform_3(%arg0: i32) -> (i32, i32) {
    %c0_i32 = arith.constant 0 : i32
    %c0_i32_0 = arith.constant 0 : i32
    %c0_i32_1 = arith.constant 0 : i32
    return %c0_i32, %c0_i32_0 : i32, i32
  }
  func.func @transform_4(%arg0: i32) -> (i32, i32) {
    %c0_i32 = arith.constant 0 : i32
    %c0_i32_0 = arith.constant 0 : i32
    %c0_i32_1 = arith.constant 0 : i32
    return %c0_i32, %c0_i32_0 : i32, i32
  }
  func.func @transform_5(%arg0: i32) -> (i32, i32) {
    %c0_i32 = arith.constant 0 : i32
    %c0_i32_0 = arith.constant 0 : i32
    %c0_i32_1 = arith.constant 0 : i32
    return %c0_i32, %c0_i32_0 : i32, i32
  }
  func.func @transform_6(%arg0: i32) -> (i32, i32) {
    %c0_i32 = arith.constant 0 : i32
    %c0_i32_0 = arith.constant 0 : i32
    %c0_i32_1 = arith.constant 0 : i32
    return %c0_i32, %c0_i32_0 : i32, i32
  }
  func.func @transform_7(%arg0: i32) -> (i32, i32, i32, i32) {
    %c0_i32 = arith.constant 0 : i32
    %c0_i32_0 = arith.constant 0 : i32
    %c0_i32_1 = arith.constant 0 : i32
    %c0_i32_2 = arith.constant 0 : i32
    return %arg0, %c0_i32, %c0_i32_0, %c0_i32_1 : i32, i32, i32, i32
  }
}

</mosaic_0001>

<llo_original>
// kernel: tpu_custom_call.1
$region0: #{tpu_custom_call.1}
  #allocation0 [shape = 'u32[]', space=smem, size = 0x4, offset = 0x4, fixed_abs, tag = 'smem constant byte address 0x4 - core index']
  #allocation1 [shape = 'u32[72,128]{1,0:T(1,128)}', space=vmem, size = 0x9000, scoped, tag = 'internal scratch']
  #allocation2 [shape = 'bf16[18,16,24]{2,1,0:T(8,128)(2,1)}', space=vmem, size = 0x12000, scoped, tag = 'scratch operand']
  %s0 = inlined_call_operand.vmem [shape: f32[2,16,16,4], index: 0, kind: input, shape index: {}]
  %s1 = inlined_call_operand.vmem [shape: bf16[4,24], index: 1, kind: input, shape index: {}]
  %s2 = inlined_call_operand.vmem [shape: f32[1,24], index: 2, kind: input, shape index: {}]
  %s3 = inlined_call_operand.vmem [shape: f32[9,24], index: 3, kind: input, shape index: {}]
  %s4 = inlined_call_operand.vmem [shape: f32[1,24], index: 4, kind: input, shape index: {}]
  %s5 = inlined_call_operand.vmem [shape: bf16[24,4], index: 5, kind: input, shape index: {}]
  %s6 = inlined_call_operand.vmem [shape: f32[1,4], index: 6, kind: input, shape index: {}]
  %s7 = inlined_call_operand.vmem [shape: f32[2,16,16,4], index: 7, kind: output, shape index: {}]
  %s8 = sld [smem:[#allocation0]]
  $region61: #{tpu_custom_call.1} parent=0
    _
  %s10 = ssub.s32 1, %s8
  %s11 = scalar_select 0, %s10, %s8
  loop: start=0, step=1, limit=4
  $region2: #{tpu_custom_call.1} parent=0 // loop_pre_header
    _
  $region3: #{tpu_custom_call.1} parent=0 // loop_header
    %s13 = sphi 0, %s17
    %p14 = scmp.ge.s32.totalorder %s13, 4
    %s23 = sphi 0, %s25
    %s26 = sphi 0, %s23
    %s27 = sphi 0, %s26
    %s43 = sphi 0, %s27
    %s47 = sphi 0, %s47
    %s49 = sphi 0, %s47
    %s50 = sphi 0, %s49
    %s64 = sphi 0, %s50
    %s68 = sphi 0, %s68
    %s70 = sphi 0, %s68
    %s71 = sphi 0, %s70
    %s85 = sphi 0, %s71
    %s89 = sphi 0, %s89
    %s91 = sphi 0, %s89
    %s92 = sphi 0, %s91
    %s106 = sphi 0, %s92
    %s110 = sphi 0, %s110
    %s112 = sphi 0, %s110
    %s113 = sphi 0, %s112
    %s127 = sphi 0, %s113
    %s131 = sphi 0, %s131
    %s133 = sphi 0, %s131
    %s134 = sphi 0, %s133
    %s148 = sphi 0, %s134
    %s152 = sphi 0, %s152
    %s154 = sphi 0, %s152
    %s155 = sphi 0, %s154
    %s169 = sphi 0, %s155
    %s175 = sphi 0, %s177
    %s178 = sphi 0, %s175
    %s179 = sphi 0, %s178
    %s195 = sphi 0, %s179
  $region4: #{tpu_custom_call.1} parent=0 // loop_header_branch
    %16 = sbr.rel (%p14) target = $region8
  $region5: #{tpu_custom_call.1} parent=0 // loop_body
    %s18 = ssub.s32 %s13, 1
    %s19 = ssub.s32 %s13, 2
    %s20 = sadd.s32 %s13, 1
    %s21 = ssub.s32 %s13, %s20
    %p22 = scmp.eq.s32.totalorder %s21, 0
    %s24 = sadd.s32 %s23, 1
    %s25 = scalar_select %p22, %s23, %s24
    %p28 = pneg %p22
    %p29 = scmp.eq.s32.totalorder %s13, 1
    %p30 = por %p28, %p29
    %p31 = scmp.ne.s32.totalorder %s23, %s26
    %p32 = scmp.eq.s32.totalorder %s13, 0
    %p33 = por %p31, %p32
    %p34 = scmp.ne.s32.totalorder %s23, %s26
    %p35 = scmp.eq.s32.totalorder %s18, 1
    %p36 = por %p34, %p35
    %p37 = scmp.ne.s32.totalorder %s26, %s27
    %p38 = scmp.eq.s32.totalorder %s18, 0
    %p39 = por %p37, %p38
    %p40 = scmp.ne.s32.totalorder %s26, %s27
    %p41 = scmp.eq.s32.totalorder %s19, 1
    %p42 = por %p40, %p41
    %p44 = scmp.ne.s32.totalorder %s27, %s43
    %p45 = scmp.eq.s32.totalorder %s19, 0
    %p46 = por %p44, %p45
    %s48 = sadd.s32 %s47, 1
    %p51 = scmp.eq.s32.totalorder %s13, 1
    %p52 = scmp.ne.s32.totalorder %s47, %s49
    %p53 = scmp.eq.s32.totalorder %s13, 0
    %p54 = por %p52, %p53
    %p55 = scmp.ne.s32.totalorder %s47, %s49
    %p56 = scmp.eq.s32.totalorder %s18, 1
    %p57 = por %p55, %p56
    %p58 = scmp.ne.s32.totalorder %s49, %s50
    %p59 = scmp.eq.s32.totalorder %s18, 0
    %p60 = por %p58, %p59
    %p61 = scmp.ne.s32.totalorder %s49, %s50
    %p62 = scmp.eq.s32.totalorder %s19, 1
    %p63 = por %p61, %p62
    %p65 = scmp.ne.s32.totalorder %s50, %s64
    %p66 = scmp.eq.s32.totalorder %s19, 0
    %p67 = por %p65, %p66
    %s69 = sadd.s32 %s68, 1
    %p72 = scmp.eq.s32.totalorder %s13, 1
    %p73 = scmp.ne.s32.totalorder %s68, %s70
    %p74 = scmp.eq.s32.totalorder %s13, 0
    %p75 = por %p73, %p74
    %p76 = scmp.ne.s32.totalorder %s68, %s70
    %p77 = scmp.eq.s32.totalorder %s18, 1
    %p78 = por %p76, %p77
    %p79 = scmp.ne.s32.totalorder %s70, %s71
    %p80 = scmp.eq.s32.totalorder %s18, 0
    %p81 = por %p79, %p80
    %p82 = scmp.ne.s32.totalorder %s70, %s71
    %p83 = scmp.eq.s32.totalorder %s19, 1
    %p84 = por %p82, %p83
    %p86 = scmp.ne.s32.totalorder %s71, %s85
    %p87 = scmp.eq.s32.totalorder %s19, 0
    %p88 = por %p86, %p87
    %s90 = sadd.s32 %s89, 1
    %p93 = scmp.eq.s32.totalorder %s13, 1
    %p94 = scmp.ne.s32.totalorder %s89, %s91
    %p95 = scmp.eq.s32.totalorder %s13, 0
    %p96 = por %p94, %p95
    %p97 = scmp.ne.s32.totalorder %s89, %s91
    %p98 = scmp.eq.s32.totalorder %s18, 1
    %p99 = por %p97, %p98
    %p100 = scmp.ne.s32.totalorder %s91, %s92
    %p101 = scmp.eq.s32.totalorder %s18, 0
    %p102 = por %p100, %p101
    %p103 = scmp.ne.s32.totalorder %s91, %s92
    %p104 = scmp.eq.s32.totalorder %s19, 1
    %p105 = por %p103, %p104
    %p107 = scmp.ne.s32.totalorder %s92, %s106
    %p108 = scmp.eq.s32.totalorder %s19, 0
    %p109 = por %p107, %p108
    %s111 = sadd.s32 %s110, 1
    %p114 = scmp.eq.s32.totalorder %s13, 1
    %p115 = scmp.ne.s32.totalorder %s110, %s112
    %p116 = scmp.eq.s32.totalorder %s13, 0
    %p117 = por %p115, %p116
    %p118 = scmp.ne.s32.totalorder %s110, %s112
    %p119 = scmp.eq.s32.totalorder %s18, 1
    %p120 = por %p118, %p119
    %p121 = scmp.ne.s32.totalorder %s112, %s113
    %p122 = scmp.eq.s32.totalorder %s18, 0
    %p123 = por %p121, %p122
    %p124 = scmp.ne.s32.totalorder %s112, %s113
    %p125 = scmp.eq.s32.totalorder %s19, 1
    %p126 = por %p124, %p125
    %p128 = scmp.ne.s32.totalorder %s113, %s127
    %p129 = scmp.eq.s32.totalorder %s19, 0
    %p130 = por %p128, %p129
    %s132 = sadd.s32 %s131, 1
    %p135 = scmp.eq.s32.totalorder %s13, 1
    %p136 = scmp.ne.s32.totalorder %s131, %s133
    %p137 = scmp.eq.s32.totalorder %s13, 0
    %p138 = por %p136, %p137
    %p139 = scmp.ne.s32.totalorder %s131, %s133
    %p140 = scmp.eq.s32.totalorder %s18, 1
    %p141 = por %p139, %p140
    %p142 = scmp.ne.s32.totalorder %s133, %s134
    %p143 = scmp.eq.s32.totalorder %s18, 0
    %p144 = por %p142, %p143
    %p145 = scmp.ne.s32.totalorder %s133, %s134
    %p146 = scmp.eq.s32.totalorder %s19, 1
    %p147 = por %p145, %p146
    %p149 = scmp.ne.s32.totalorder %s134, %s148
    %p150 = scmp.eq.s32.totalorder %s19, 0
    %p151 = por %p149, %p150
    %s153 = sadd.s32 %s152, 1
    %p156 = scmp.eq.s32.totalorder %s13, 1
    %p157 = scmp.ne.s32.totalorder %s152, %s154
    %p158 = scmp.eq.s32.totalorder %s13, 0
    %p159 = por %p157, %p158
    %p160 = scmp.ne.s32.totalorder %s152, %s154
    %p161 = scmp.eq.s32.totalorder %s18, 1
    %p162 = por %p160, %p161
    %p163 = scmp.ne.s32.totalorder %s154, %s155
    %p164 = scmp.eq.s32.totalorder %s18, 0
    %p165 = por %p163, %p164
    %p166 = scmp.ne.s32.totalorder %s154, %s155
    %p167 = scmp.eq.s32.totalorder %s19, 1
    %p168 = por %p166, %p167
    %p170 = scmp.ne.s32.totalorder %s155, %s169
    %p171 = scmp.eq.s32.totalorder %s19, 0
    %p172 = por %p170, %p171
    %s173 = ssub.s32 %s13, %s20
    %p174 = scmp.eq.s32.totalorder %s173, 0
    %s176 = sadd.s32 %s175, 1
    %s177 = scalar_select %p174, %s175, %s176
    %p180 = pneg %p174
    %p181 = scmp.eq.s32.totalorder %s13, 1
    %p182 = por %p180, %p181
    %p183 = scmp.ne.s32.totalorder %s175, %s178
    %p184 = scmp.eq.s32.totalorder %s13, 0
    %p185 = por %p183, %p184
    %p186 = scmp.ne.s32.totalorder %s175, %s178
    %p187 = scmp.eq.s32.totalorder %s18, 1
    %p188 = por %p186, %p187
    %p189 = scmp.ne.s32.totalorder %s178, %s179
    %p190 = scmp.eq.s32.totalorder %s18, 0
    %p191 = por %p189, %p190
    %p192 = scmp.ne.s32.totalorder %s178, %s179
    %p193 = scmp.eq.s32.totalorder %s19, 1
    %p194 = por %p192, %p193
    %p196 = scmp.ne.s32.totalorder %s179, %s195
    %p197 = scmp.eq.s32.totalorder %s19, 0
    %p198 = por %p196, %p197
    %p199 = scmp.le.s32.totalorder 1, %s13
    %p200 = scmp.lt.s32.totalorder %s13, 3
    %p201 = pnand %p199, %p200
    %p202 = pneg %p201
    // Predicated region
    $region9: #{tpu_custom_call.1} parent=5 // pred_check
      _
    $region10: #{tpu_custom_call.1} parent=5 // pred_check_branch
      %204 = sbr.rel (%p201) target = $region12
    $region11: #{tpu_custom_call.1} parent=5 // pred_region
      %s205 = ssub.s32 %s13, 1
      // Predicated region
      $region13: #{tpu_custom_call.1} parent=11 // pred_check
        %p206 = pneg %p60
      $region14: #{tpu_custom_call.1} parent=11 // pred_check_branch
        %208 = sbr.rel (%p206) target = $region16
      $region15: #{tpu_custom_call.1} parent=11 // pred_region
        _
      $region16: #{tpu_custom_call.1} parent=11 // pred_fallthru
        _
      // Predicated region
      $region17: #{tpu_custom_call.1} parent=11 // pred_check
        %p209 = pneg %p81
      $region18: #{tpu_custom_call.1} parent=11 // pred_check_branch
        %211 = sbr.rel (%p209) target = $region20
      $region19: #{tpu_custom_call.1} parent=11 // pred_region
        _
      $region20: #{tpu_custom_call.1} parent=11 // pred_fallthru
        _
      // Predicated region
      $region21: #{tpu_custom_call.1} parent=11 // pred_check
        %p212 = pneg %p102
      $region22: #{tpu_custom_call.1} parent=11 // pred_check_branch
        %214 = sbr.rel (%p212) target = $region24
      $region23: #{tpu_custom_call.1} parent=11 // pred_region
        _
      $region24: #{tpu_custom_call.1} parent=11 // pred_fallthru
        _
      // Predicated region
      $region25: #{tpu_custom_call.1} parent=11 // pred_check
        %p215 = pneg %p123
      $region26: #{tpu_custom_call.1} parent=11 // pred_check_branch
        %217 = sbr.rel (%p215) target = $region28
      $region27: #{tpu_custom_call.1} parent=11 // pred_region
        _
      $region28: #{tpu_custom_call.1} parent=11 // pred_fallthru
        _
      // Predicated region
      $region29: #{tpu_custom_call.1} parent=11 // pred_check
        %p218 = pneg %p144
      $region30: #{tpu_custom_call.1} parent=11 // pred_check_branch
        %220 = sbr.rel (%p218) target = $region32
      $region31: #{tpu_custom_call.1} parent=11 // pred_region
        _
      $region32: #{tpu_custom_call.1} parent=11 // pred_fallthru
        _
      // Predicated region
      $region33: #{tpu_custom_call.1} parent=11 // pred_check
        %p221 = pneg %p165
      $region34: #{tpu_custom_call.1} parent=11 // pred_check_branch
        %223 = sbr.rel (%p221) target = $region36
      $region35: #{tpu_custom_call.1} parent=11 // pred_region
        _
      $region36: #{tpu_custom_call.1} parent=11 // pred_fallthru
        _
    $region12: #{tpu_custom_call.1} parent=5 // pred_fallthru
      _
    %p224 = scmp.lt.s32.totalorder %s13, 2
    // Predicated region
    $region37: #{tpu_custom_call.1} parent=5 // pred_check
      %p225 = pneg %p224
    $region38: #{tpu_custom_call.1} parent=5 // pred_check_branch
      %227 = sbr.rel (%p225) target = $region40
    $region39: #{tpu_custom_call.1} parent=5 // pred_region
      // Predicated region
      $region41: #{tpu_custom_call.1} parent=39 // pred_check
        %p228 = pneg %p33
      $region42: #{tpu_custom_call.1} parent=39 // pred_check_branch
        %230 = sbr.rel (%p228) target = $region44
      $region43: #{tpu_custom_call.1} parent=39 // pred_region
        %p231 = scmp.lt.s32.totalorder %s13, 1
        %s232 = scalar_select %p231, %s13, 1
        %s233 = smul.addr %s232, 32
        %s234 = smul.addr %s233, 8
        %s235 = scalar_lea.vmem %s0, %s234
      $region44: #{tpu_custom_call.1} parent=39 // pred_fallthru
        _
    $region40: #{tpu_custom_call.1} parent=5 // pred_fallthru
      _
    %p236 = scmp.le.s32.totalorder 1, %s13
    %p237 = scmp.lt.s32.totalorder %s13, 3
    %p238 = pnand %p236, %p237
    %p239 = pneg %p238
    // Predicated region
    $region45: #{tpu_custom_call.1} parent=5 // pred_check
      _
    $region46: #{tpu_custom_call.1} parent=5 // pred_check_branch
      %241 = sbr.rel (%p238) target = $region48
    $region47: #{tpu_custom_call.1} parent=5 // pred_region
      %s242 = ssub.s32 %s13, 1
      %p243 = scmp.lt.s32.totalorder %s18, 1
      %s244 = scalar_select %p243, %s18, 1
      %s245 = smul.addr %s244, 32
      %s246 = smul.addr %s245, 8
      %s247 = scalar_lea.vmem %s0, %s246
      %p248 = pneg %p39
      %p249 = pneg %p36
      %p250 = pneg %p60
      %p251 = pneg %p57
      %p252 = pneg %p81
      %p253 = pneg %p78
      %p254 = pneg %p102
      %p255 = pneg %p99
      %p256 = pneg %p123
      %p257 = pneg %p120
      %p258 = pneg %p144
      %p259 = pneg %p141
      %p260 = pneg %p165
      %p261 = pneg %p162
      %p262 = pneg %p191
      %p263 = pneg %p188
      %p264 = scmp.lt.s32.totalorder %s18, 1
      %s265 = scalar_select %p264, %s18, 1
      %s266 = smul.addr %s265, 32
      %s267 = smul.addr %s266, 8
      %s268 = scalar_lea.vmem %s7, %s267
      %p269 = scmp.lt.s32.totalorder %s18, 1
      %s270 = scalar_select %p269, %s18, 1
      %s271 = smul.addr %s270, 32
      %s272 = smul.addr %s271, 8
      %s273 = scalar_lea.vmem %s0, %s272
      %p274 = scmp.lt.s32.totalorder %s18, 1
      %s275 = scalar_select %p274, %s18, 1
      %s276 = smul.addr %s275, 32
      %s277 = smul.addr %s276, 8
      %s278 = scalar_lea.vmem %s7, %s277
      %vm280 = vcmask 191488
      %281 = vst.msk [vmem:[#allocation2] sm:$0xf] %vm280, 0
      %282 = vst.msk [vmem:[#allocation2 + $0x4] sm:$0xf] %vm280, 0
      %s283 = scalar_lea.vmem [#allocation2], 136
      %284 = vst.msk [vmem:[%s283] sm:$0xf] %vm280, 0
      %285 = vst.msk [vmem:[%s283 + $0x4] sm:$0xf] %vm280, 0
      %v286 = vld [vmem:[%s273] sm:$0xff]
      %v287 = vld [vmem:[%s273 + $0x8] sm:$0xff]
      %v288 = vld [vmem:[%s273 + $0x10] sm:$0xff]
      %v289 = vld [vmem:[%s273 + $0x18] sm:$0xff]
      %v290 = vld [vmem:[%s273 + $0x20] sm:$0xff]
      %v291 = vld [vmem:[%s273 + $0x28] sm:$0xff]
      %v292 = vld [vmem:[%s273 + $0x30] sm:$0xff]
      %v293 = vld [vmem:[%s273 + $0x38] sm:$0xff]
      %v294 = vld [vmem:[%s273 + $0x40] sm:$0xff]
      %v295 = vld [vmem:[%s273 + $0x48] sm:$0xff]
      %v296 = vld [vmem:[%s273 + $0x50] sm:$0xff]
      %v297 = vld [vmem:[%s273 + $0x58] sm:$0xff]
      %v298 = vld [vmem:[%s273 + $0x60] sm:$0xff]
      %v299 = vld [vmem:[%s273 + $0x68] sm:$0xff]
      %v300 = vld [vmem:[%s273 + $0x70] sm:$0xff]
      %v301 = vld [vmem:[%s273 + $0x78] sm:$0xff]
      %v302 = vpack.c.bf16 %v287, %v286
      %v303 = vpack.c.bf16 %v289, %v288
      %v304 = vpack.c.bf16 %v291, %v290
      %v305 = vpack.c.bf16 %v293, %v292
      %v306 = vpack.c.bf16 %v295, %v294
      %v307 = vpack.c.bf16 %v297, %v296
      %v308 = vpack.c.bf16 %v299, %v298
      %v309 = vpack.c.bf16 %v301, %v300
      %v310 = vld [vmem:[%s1] sm:$0x3]
      %v311 = vld [vmem:[%s2] sm:$0x1]
      %v313 = vperm.slane %v311, 0
      %vm315 = vcmask 31744
      %v317 = vsel %vm315, %v302, 0
      %v320 = vsel %vm315, %v303, 0
      %v323 = vsel %vm315, %v304, 0
      %v326 = vsel %vm315, %v305, 0
      %v329 = vsel %vm315, %v306, 0
      %v332 = vsel %vm315, %v307, 0
      %v335 = vsel %vm315, %v308, 0
      %v338 = vsel %vm315, %v309, 0
      %vm340 = vcmask 1041408
      %v342 = vsel %vm340, %v310, 0
      %344 = vmatpush.bf16.msra.mxu0 0
      %345 = vmatpush.bf16.msra.mxu0 0
      %346 = vmatpush.bf16.msra.mxu0 0
      %347 = vmatpush.bf16.msra.mxu0 0
      %348 = vmatpush.bf16.msra.mxu0 0
      %349 = vmatpush.bf16.msra.mxu0 0
      %350 = vmatpush.bf16.msra.mxu0 0
      %351 = vmatpush.bf16.msra.mxu0 %v342
      %352 = vmatmul.bf16.gmra.mxu0 %v317
      %v353 = vpop.f32.mrf.mxu0
      %v354 = vadd.f32 %v313, %v353
      %v355 = vpop.f32.mrf.mxu0
      %v356 = vadd.f32 %v313, %v355
      %357 = vmatmul.bf16.gmra.mxu0 %v320
      %v358 = vpop.f32.mrf.mxu0
      %v359 = vadd.f32 %v313, %v358
      %v360 = vpop.f32.mrf.mxu0
      %v361 = vadd.f32 %v313, %v360
      %362 = vmatmul.bf16.gmra.mxu0 %v323
      %v363 = vpop.f32.mrf.mxu0
      %v364 = vadd.f32 %v313, %v363
      %v365 = vpop.f32.mrf.mxu0
      %v366 = vadd.f32 %v313, %v365
      %367 = vmatmul.bf16.gmra.mxu0 %v326
      %v368 = vpop.f32.mrf.mxu0
      %v369 = vadd.f32 %v313, %v368
      %v370 = vpop.f32.mrf.mxu0
      %v371 = vadd.f32 %v313, %v370
      %372 = vmatmul.bf16.gmra.mxu0 %v329
      %v373 = vpop.f32.mrf.mxu0
      %v374 = vadd.f32 %v313, %v373
      %v375 = vpop.f32.mrf.mxu0
      %v376 = vadd.f32 %v313, %v375
      %377 = vmatmul.bf16.gmra.mxu0 %v332
      %v378 = vpop.f32.mrf.mxu0
      %v379 = vadd.f32 %v313, %v378
      %v380 = vpop.f32.mrf.mxu0
      %v381 = vadd.f32 %v313, %v380
      %382 = vmatmul.bf16.gmra.mxu0 %v335
      %v383 = vpop.f32.mrf.mxu0
      %v384 = vadd.f32 %v313, %v383
      %v385 = vpop.f32.mrf.mxu0
      %v386 = vadd.f32 %v313, %v385
      %387 = vmatmul.bf16.gmra.mxu0 %v338
      %v388 = vpop.f32.mrf.mxu0
      %v389 = vadd.f32 %v313, %v388
      %v390 = vpop.f32.mrf.mxu0
      %v391 = vadd.f32 %v313, %v390
      %392 = vdwg.mxu0
      %v393 = vmax.f32 %v354, 0.0
      %v394 = vmax.f32 %v356, 0.0
      %v395 = vmax.f32 %v359, 0.0
      %v396 = vmax.f32 %v361, 0.0
      %v397 = vmax.f32 %v364, 0.0
      %v398 = vmax.f32 %v366, 0.0
      %v399 = vmax.f32 %v369, 0.0
      %v400 = vmax.f32 %v371, 0.0
      %v401 = vmax.f32 %v374, 0.0
      %v402 = vmax.f32 %v376, 0.0
      %v403 = vmax.f32 %v379, 0.0
      %v404 = vmax.f32 %v381, 0.0
      %v405 = vmax.f32 %v384, 0.0
      %v406 = vmax.f32 %v386, 0.0
      %v407 = vmax.f32 %v389, 0.0
      %v408 = vmax.f32 %v391, 0.0
      %v409 = vmin.f32 %v393, 6.0
      %v410 = vmin.f32 %v394, 6.0
      %v411 = vmin.f32 %v395, 6.0
      %v412 = vmin.f32 %v396, 6.0
      %v413 = vmin.f32 %v397, 6.0
      %v414 = vmin.f32 %v398, 6.0
      %v415 = vmin.f32 %v399, 6.0
      %v416 = vmin.f32 %v400, 6.0
      %v417 = vmin.f32 %v401, 6.0
      %v418 = vmin.f32 %v402, 6.0
      %v419 = vmin.f32 %v403, 6.0
      %v420 = vmin.f32 %v404, 6.0
      %v421 = vmin.f32 %v405, 6.0
      %v422 = vmin.f32 %v406, 6.0
      %v423 = vmin.f32 %v407, 6.0
      %v424 = vmin.f32 %v408, 6.0
      %v425 = vpack.c.bf16 %v409, %v409
      %v426 = vpack.c.bf16 %v410, %v410
      %v427 = vpack.c.bf16 %v411, %v411
      %v428 = vpack.c.bf16 %v412, %v412
      %v429 = vpack.c.bf16 %v413, %v413
      %v430 = vpack.c.bf16 %v414, %v414
      %v431 = vpack.c.bf16 %v415, %v415
      %v432 = vpack.c.bf16 %v416, %v416
      %v433 = vpack.c.bf16 %v417, %v417
      %v434 = vpack.c.bf16 %v418, %v418
      %v435 = vpack.c.bf16 %v419, %v419
      %v436 = vpack.c.bf16 %v420, %v420
      %v437 = vpack.c.bf16 %v421, %v421
      %v438 = vpack.c.bf16 %v422, %v422
      %v439 = vpack.c.bf16 %v423, %v423
      %v440 = vpack.c.bf16 %v424, %v424
      %s441 = scalar_lea.vmem [#allocation2], 8
      %442 = vst.msk [vmem:[%s441] sm:$0xf] %vm280, %v425
      %443 = vst.msk [vmem:[%s441 + $0x4] sm:$0xf] %vm280, %v426
      %444 = vst.msk [vmem:[%s441 + $0x8] sm:$0xf] %vm280, %v427
      %445 = vst.msk [vmem:[%s441 + $0xc] sm:$0xf] %vm280, %v428
      %446 = vst.msk [vmem:[%s441 + $0x10] sm:$0xf] %vm280, %v429
      %447 = vst.msk [vmem:[%s441 + $0x14] sm:$0xf] %vm280, %v430
      %448 = vst.msk [vmem:[%s441 + $0x18] sm:$0xf] %vm280, %v431
      %449 = vst.msk [vmem:[%s441 + $0x1c] sm:$0xf] %vm280, %v432
      %450 = vst.msk [vmem:[%s441 + $0x20] sm:$0xf] %vm280, %v433
      %451 = vst.msk [vmem:[%s441 + $0x24] sm:$0xf] %vm280, %v434
      %452 = vst.msk [vmem:[%s441 + $0x28] sm:$0xf] %vm280, %v435
      %453 = vst.msk [vmem:[%s441 + $0x2c] sm:$0xf] %vm280, %v436
      %454 = vst.msk [vmem:[%s441 + $0x30] sm:$0xf] %vm280, %v437
      %455 = vst.msk [vmem:[%s441 + $0x34] sm:$0xf] %vm280, %v438
      %456 = vst.msk [vmem:[%s441 + $0x38] sm:$0xf] %vm280, %v439
      %457 = vst.msk [vmem:[%s441 + $0x3c] sm:$0xf] %vm280, %v440
      %s458 = scalar_lea.vmem %s273, 128
      %v459 = vld [vmem:[%s458] sm:$0xff]
      %v460 = vld [vmem:[%s458 + $0x8] sm:$0xff]
      %v461 = vld [vmem:[%s458 + $0x10] sm:$0xff]
      %v462 = vld [vmem:[%s458 + $0x18] sm:$0xff]
      %v463 = vld [vmem:[%s458 + $0x20] sm:$0xff]
      %v464 = vld [vmem:[%s458 + $0x28] sm:$0xff]
      %v465 = vld [vmem:[%s458 + $0x30] sm:$0xff]
      %v466 = vld [vmem:[%s458 + $0x38] sm:$0xff]
      %v467 = vld [vmem:[%s458 + $0x40] sm:$0xff]
      %v468 = vld [vmem:[%s458 + $0x48] sm:$0xff]
      %v469 = vld [vmem:[%s458 + $0x50] sm:$0xff]
      %v470 = vld [vmem:[%s458 + $0x58] sm:$0xff]
      %v471 = vld [vmem:[%s458 + $0x60] sm:$0xff]
      %v472 = vld [vmem:[%s458 + $0x68] sm:$0xff]
      %v473 = vld [vmem:[%s458 + $0x70] sm:$0xff]
      %v474 = vld [vmem:[%s458 + $0x78] sm:$0xff]
      %v475 = vpack.c.bf16 %v460, %v459
      %v476 = vpack.c.bf16 %v462, %v461
      %v477 = vpack.c.bf16 %v464, %v463
      %v478 = vpack.c.bf16 %v466, %v465
      %v479 = vpack.c.bf16 %v468, %v467
      %v480 = vpack.c.bf16 %v470, %v469
      %v481 = vpack.c.bf16 %v472, %v471
      %v482 = vpack.c.bf16 %v474, %v473
      %v483 = vld [vmem:[%s1] sm:$0x3]
      %v484 = vld [vmem:[%s2] sm:$0x1]
      %v486 = vperm.slane %v484, 0
      %v489 = vsel %vm315, %v475, 0
      %v492 = vsel %vm315, %v476, 0
      %v495 = vsel %vm315, %v477, 0
      %v498 = vsel %vm315, %v478, 0
      %v501 = vsel %vm315, %v479, 0
      %v504 = vsel %vm315, %v480, 0
      %v507 = vsel %vm315, %v481, 0
      %v510 = vsel %vm315, %v482, 0
      %v513 = vsel %vm340, %v483, 0
      %515 = vmatpush.bf16.msra.mxu0 0
      %516 = vmatpush.bf16.msra.mxu0 0
      %517 = vmatpush.bf16.msra.mxu0 0
      %518 = vmatpush.bf16.msra.mxu0 0
      %519 = vmatpush.bf16.msra.mxu0 0
      %520 = vmatpush.bf16.msra.mxu0 0
      %521 = vmatpush.bf16.msra.mxu0 0
      %522 = vmatpush.bf16.msra.mxu0 %v513
      %523 = vmatmul.bf16.gmra.mxu0 %v489
      %v524 = vpop.f32.mrf.mxu0
      %v525 = vadd.f32 %v486, %v524
      %v526 = vpop.f32.mrf.mxu0
      %v527 = vadd.f32 %v486, %v526
      %528 = vmatmul.bf16.gmra.mxu0 %v492
      %v529 = vpop.f32.mrf.mxu0
      %v530 = vadd.f32 %v486, %v529
      %v531 = vpop.f32.mrf.mxu0
      %v532 = vadd.f32 %v486, %v531
      %533 = vmatmul.bf16.gmra.mxu0 %v495
      %v534 = vpop.f32.mrf.mxu0
      %v535 = vadd.f32 %v486, %v534
      %v536 = vpop.f32.mrf.mxu0
      %v537 = vadd.f32 %v486, %v536
      %538 = vmatmul.bf16.gmra.mxu0 %v498
      %v539 = vpop.f32.mrf.mxu0
      %v540 = vadd.f32 %v486, %v539
      %v541 = vpop.f32.mrf.mxu0
      %v542 = vadd.f32 %v486, %v541
      %543 = vmatmul.bf16.gmra.mxu0 %v501
      %v544 = vpop.f32.mrf.mxu0
      %v545 = vadd.f32 %v486, %v544
      %v546 = vpop.f32.mrf.mxu0
      %v547 = vadd.f32 %v486, %v546
      %548 = vmatmul.bf16.gmra.mxu0 %v504
      %v549 = vpop.f32.mrf.mxu0
      %v550 = vadd.f32 %v486, %v549
      %v551 = vpop.f32.mrf.mxu0
      %v552 = vadd.f32 %v486, %v551
      %553 = vmatmul.bf16.gmra.mxu0 %v507
      %v554 = vpop.f32.mrf.mxu0
      %v555 = vadd.f32 %v486, %v554
      %v556 = vpop.f32.mrf.mxu0
      %v557 = vadd.f32 %v486, %v556
      %558 = vmatmul.bf16.gmra.mxu0 %v510
      %v559 = vpop.f32.mrf.mxu0
      %v560 = vadd.f32 %v486, %v559
      %v561 = vpop.f32.mrf.mxu0
      %v562 = vadd.f32 %v486, %v561
      %563 = vdwg.mxu0
      %v564 = vmax.f32 %v525, 0.0
      %v565 = vmax.f32 %v527, 0.0
      %v566 = vmax.f32 %v530, 0.0
      %v567 = vmax.f32 %v532, 0.0
      %v568 = vmax.f32 %v535, 0.0
      %v569 = vmax.f32 %v537, 0.0
      %v570 = vmax.f32 %v540, 0.0
      %v571 = vmax.f32 %v542, 0.0
      %v572 = vmax.f32 %v545, 0.0
      %v573 = vmax.f32 %v547, 0.0
      %v574 = vmax.f32 %v550, 0.0
      %v575 = vmax.f32 %v552, 0.0
      %v576 = vmax.f32 %v555, 0.0
      %v577 = vmax.f32 %v557, 0.0
      %v578 = vmax.f32 %v560, 0.0
      %v579 = vmax.f32 %v562, 0.0
      %v580 = vmin.f32 %v564, 6.0
      %v581 = vmin.f32 %v565, 6.0
      %v582 = vmin.f32 %v566, 6.0
      %v583 = vmin.f32 %v567, 6.0
      %v584 = vmin.f32 %v568, 6.0
      %v585 = vmin.f32 %v569, 6.0
      %v586 = vmin.f32 %v570, 6.0
      %v587 = vmin.f32 %v571, 6.0
      %v588 = vmin.f32 %v572, 6.0
      %v589 = vmin.f32 %v573, 6.0
      %v590 = vmin.f32 %v574, 6.0
      %v591 = vmin.f32 %v575, 6.0
      %v592 = vmin.f32 %v576, 6.0
      %v593 = vmin.f32 %v577, 6.0
      %v594 = vmin.f32 %v578, 6.0
      %v595 = vmin.f32 %v579, 6.0
      %v596 = vpack.c.bf16 %v580, %v580
      %v597 = vpack.c.bf16 %v581, %v581
      %v598 = vpack.c.bf16 %v582, %v582
      %v599 = vpack.c.bf16 %v583, %v583
      %v600 = vpack.c.bf16 %v584, %v584
      %v601 = vpack.c.bf16 %v585, %v585
      %v602 = vpack.c.bf16 %v586, %v586
      %v603 = vpack.c.bf16 %v587, %v587
      %v604 = vpack.c.bf16 %v588, %v588
      %v605 = vpack.c.bf16 %v589, %v589
      %v606 = vpack.c.bf16 %v590, %v590
      %v607 = vpack.c.bf16 %v591, %v591
      %v608 = vpack.c.bf16 %v592, %v592
      %v609 = vpack.c.bf16 %v593, %v593
      %v610 = vpack.c.bf16 %v594, %v594
      %v611 = vpack.c.bf16 %v595, %v595
      %s612 = scalar_lea.vmem [#allocation2], 72
      %613 = vst.msk [vmem:[%s612] sm:$0xf] %vm280, %v596
      %614 = vst.msk [vmem:[%s612 + $0x4] sm:$0xf] %vm280, %v597
      %615 = vst.msk [vmem:[%s612 + $0x8] sm:$0xf] %vm280, %v598
      %616 = vst.msk [vmem:[%s612 + $0xc] sm:$0xf] %vm280, %v599
      %617 = vst.msk [vmem:[%s612 + $0x10] sm:$0xf] %vm280, %v600
      %618 = vst.msk [vmem:[%s612 + $0x14] sm:$0xf] %vm280, %v601
      %619 = vst.msk [vmem:[%s612 + $0x18] sm:$0xf] %vm280, %v602
      %620 = vst.msk [vmem:[%s612 + $0x1c] sm:$0xf] %vm280, %v603
      %621 = vst.msk [vmem:[%s612 + $0x20] sm:$0xf] %vm280, %v604
      %622 = vst.msk [vmem:[%s612 + $0x24] sm:$0xf] %vm280, %v605
      %623 = vst.msk [vmem:[%s612 + $0x28] sm:$0xf] %vm280, %v606
      %624 = vst.msk [vmem:[%s612 + $0x2c] sm:$0xf] %vm280, %v607
      %625 = vst.msk [vmem:[%s612 + $0x30] sm:$0xf] %vm280, %v608
      %626 = vst.msk [vmem:[%s612 + $0x34] sm:$0xf] %vm280, %v609
      %627 = vst.msk [vmem:[%s612 + $0x38] sm:$0xf] %vm280, %v610
      %628 = vst.msk [vmem:[%s612 + $0x3c] sm:$0xf] %vm280, %v611
      %v629 = vlaneseq
      %v630 = vshrl.u32 %v629, 7
      %v631 = vadd.s32 %v630, 8
      %vm632 = vcmp.ge.s32.totalorder %v630, 1
      %vm633 = vcmp.ge.s32.totalorder %v631, 1
      %v634 = vsel %vm632, 1, 0
      %v635 = vsel %vm633, 1, 0
      %v636 = vcvt.s32.f32 %v634
      %v637 = vcvt.s32.f32 %v635
      %vm638 = vcmp.lt.s32.totalorder %v630, 15
      %vm639 = vcmp.lt.s32.totalorder %v631, 15
      %v640 = vsel %vm638, 1, 0
      %v641 = vsel %vm639, 1, 0
      %v642 = vcvt.s32.f32 %v640
      %v643 = vcvt.s32.f32 %v641
      %v644 = vld [vmem:[%s3] sm:$0xff]
      %v645 = vld [vmem:[%s3 + $0x8] sm:$0x1]
      %v646 = vld [vmem:[%s4] sm:$0x1]
      %v647 = vld [vmem:[%s6] sm:$0x1]
      %v648 = vld [vmem:[%s5] sm:$0xf]
      %v649 = vld [vmem:[%s5 + $0x4] sm:$0xf]
      %v650 = vld [vmem:[%s5 + $0x8] sm:$0xf]
      %v651 = vld [vmem:[#allocation2] sm:$0xf]
      %v652 = vld [vmem:[#allocation2 + $0x4] sm:$0xf]
      %v653 = vld [vmem:[#allocation2 + $0x8] sm:$0xf]
      %v654 = vld [vmem:[#allocation2 + $0xc] sm:$0xf]
      %v655 = vld [vmem:[#allocation2 + $0x10] sm:$0xf]
      %v656 = vld [vmem:[#allocation2 + $0x14] sm:$0xf]
      %v657 = vld [vmem:[#allocation2 + $0x18] sm:$0xf]
      %v658 = vld [vmem:[#allocation2 + $0x1c] sm:$0xf]
      %v659 = vld [vmem:[#allocation2 + $0x20] sm:$0xf]
      %v660 = vld [vmem:[#allocation2 + $0x24] sm:$0xf]
      %v661 = vld [vmem:[#allocation2 + $0x28] sm:$0xf]
      %v662 = vld [vmem:[#allocation2 + $0x2c] sm:$0xf]
      %v663 = vld [vmem:[#allocation2 + $0x30] sm:$0xf]
      %v664 = vld [vmem:[#allocation2 + $0x34] sm:$0xf]
      %v665 = vld [vmem:[#allocation2 + $0x38] sm:$0xf]
      %v666 = vld [vmem:[#allocation2 + $0x3c] sm:$0xf]
      %v667 = vld [vmem:[#allocation2 + $0x40] sm:$0xf]
      %v668 = vld [vmem:[#allocation2 + $0x44] sm:$0xf]
      %v669 = vld [vmem:[#allocation2 + $0x48] sm:$0xf]
      %v670 = vld [vmem:[#allocation2 + $0x4c] sm:$0xf]
      %v671 = vunpack.c.l.bf16 %v651
      %v672 = vunpack.c.l.bf16 %v652
      %v673 = vunpack.c.l.bf16 %v653
      %v674 = vunpack.c.l.bf16 %v654
      %v675 = vunpack.c.l.bf16 %v655
      %v676 = vunpack.c.l.bf16 %v656
      %v677 = vunpack.c.l.bf16 %v657
      %v678 = vunpack.c.l.bf16 %v658
      %v679 = vunpack.c.l.bf16 %v659
      %v680 = vunpack.c.l.bf16 %v660
      %v681 = vunpack.c.l.bf16 %v661
      %v682 = vunpack.c.l.bf16 %v662
      %v683 = vunpack.c.l.bf16 %v663
      %v684 = vunpack.c.l.bf16 %v664
      %v685 = vunpack.c.l.bf16 %v665
      %v686 = vunpack.c.l.bf16 %v666
      %v687 = vunpack.c.l.bf16 %v667
      %v688 = vunpack.c.l.bf16 %v668
      %v689 = vunpack.c.l.bf16 %v669
      %v690 = vunpack.c.l.bf16 %v670
      %v691 = vrot.slane %v671, 7
      %v692 = vrot.slane %v673, 7
      %v693 = vrot.slane %v675, 7
      %v694 = vrot.slane %v677, 7
      %v695 = vrot.slane %v679, 7
      %v696 = vrot.slane %v681, 7
      %v697 = vrot.slane %v683, 7
      %v698 = vrot.slane %v685, 7
      %v699 = vrot.slane %v687, 7
      %v700 = vrot.slane %v689, 7
      %v701 = vrot.slane %v672, 7
      %v702 = vrot.slane %v674, 7
      %v703 = vrot.slane %v676, 7
      %v704 = vrot.slane %v678, 7
      %v705 = vrot.slane %v680, 7
      %v706 = vrot.slane %v682, 7
      %v707 = vrot.slane %v684, 7
      %v708 = vrot.slane %v686, 7
      %v709 = vrot.slane %v688, 7
      %v710 = vrot.slane %v690, 7
      %vm711 = vcmp.lt.s32.totalorder %v630, 1
      %v712 = vsel %vm711, %v691, %v701
      %v713 = vsel %vm711, %v692, %v702
      %v714 = vsel %vm711, %v693, %v703
      %v715 = vsel %vm711, %v694, %v704
      %v716 = vsel %vm711, %v695, %v705
      %v717 = vsel %vm711, %v696, %v706
      %v718 = vsel %vm711, %v697, %v707
      %v719 = vsel %vm711, %v698, %v708
      %v720 = vsel %vm711, %v699, %v709
      %v721 = vsel %vm711, %v700, %v710
      %v722 = vsel %vm711, %v701, %v691
      %v723 = vsel %vm711, %v702, %v692
      %v724 = vsel %vm711, %v703, %v693
      %v725 = vsel %vm711, %v704, %v694
      %v726 = vsel %vm711, %v705, %v695
      %v727 = vsel %vm711, %v706, %v696
      %v728 = vsel %vm711, %v707, %v697
      %v729 = vsel %vm711, %v708, %v698
      %v730 = vsel %vm711, %v709, %v699
      %v731 = vsel %vm711, %v710, %v700
      %v732 = vmul.f32 %v722, %v636
      %v733 = vmul.f32 %v712, %v637
      %v734 = vmul.f32 %v723, %v636
      %v735 = vmul.f32 %v713, %v637
      %v736 = vmul.f32 %v724, %v636
      %v737 = vmul.f32 %v714, %v637
      %v738 = vmul.f32 %v725, %v636
      %v739 = vmul.f32 %v715, %v637
      %v740 = vmul.f32 %v726, %v636
      %v741 = vmul.f32 %v716, %v637
      %v742 = vmul.f32 %v727, %v636
      %v743 = vmul.f32 %v717, %v637
      %v744 = vmul.f32 %v728, %v636
      %v745 = vmul.f32 %v718, %v637
      %v746 = vmul.f32 %v729, %v636
      %v747 = vmul.f32 %v719, %v637
      %v748 = vmul.f32 %v730, %v636
      %v749 = vmul.f32 %v720, %v637
      %v750 = vmul.f32 %v731, %v636
      %v751 = vmul.f32 %v721, %v637
      %v752 = vrot.slane %v671, 1
      %v753 = vrot.slane %v673, 1
      %v754 = vrot.slane %v675, 1
      %v755 = vrot.slane %v677, 1
      %v756 = vrot.slane %v679, 1
      %v757 = vrot.slane %v681, 1
      %v758 = vrot.slane %v683, 1
      %v759 = vrot.slane %v685, 1
      %v760 = vrot.slane %v687, 1
      %v761 = vrot.slane %v689, 1
      %v762 = vrot.slane %v672, 1
      %v763 = vrot.slane %v674, 1
      %v764 = vrot.slane %v676, 1
      %v765 = vrot.slane %v678, 1
      %v766 = vrot.slane %v680, 1
      %v767 = vrot.slane %v682, 1
      %v768 = vrot.slane %v684, 1
      %v769 = vrot.slane %v686, 1
      %v770 = vrot.slane %v688, 1
      %v771 = vrot.slane %v690, 1
      %vm772 = vcmp.lt.s32.totalorder %v630, 7
      %v773 = vsel %vm772, %v752, %v762
      %v774 = vsel %vm772, %v753, %v763
      %v775 = vsel %vm772, %v754, %v764
      %v776 = vsel %vm772, %v755, %v765
      %v777 = vsel %vm772, %v756, %v766
      %v778 = vsel %vm772, %v757, %v767
      %v779 = vsel %vm772, %v758, %v768
      %v780 = vsel %vm772, %v759, %v769
      %v781 = vsel %vm772, %v760, %v770
      %v782 = vsel %vm772, %v761, %v771
      %v783 = vsel %vm772, %v762, %v752
      %v784 = vsel %vm772, %v763, %v753
      %v785 = vsel %vm772, %v764, %v754
      %v786 = vsel %vm772, %v765, %v755
      %v787 = vsel %vm772, %v766, %v756
      %v788 = vsel %vm772, %v767, %v757
      %v789 = vsel %vm772, %v768, %v758
      %v790 = vsel %vm772, %v769, %v759
      %v791 = vsel %vm772, %v770, %v760
      %v792 = vsel %vm772, %v771, %v761
      %v793 = vmul.f32 %v773, %v642
      %v794 = vmul.f32 %v783, %v643
      %v795 = vmul.f32 %v774, %v642
      %v796 = vmul.f32 %v784, %v643
      %v797 = vmul.f32 %v775, %v642
      %v798 = vmul.f32 %v785, %v643
      %v799 = vmul.f32 %v776, %v642
      %v800 = vmul.f32 %v786, %v643
      %v801 = vmul.f32 %v777, %v642
      %v802 = vmul.f32 %v787, %v643
      %v803 = vmul.f32 %v778, %v642
      %v804 = vmul.f32 %v788, %v643
      %v805 = vmul.f32 %v779, %v642
      %v806 = vmul.f32 %v789, %v643
      %v807 = vmul.f32 %v780, %v642
      %v808 = vmul.f32 %v790, %v643
      %v809 = vmul.f32 %v781, %v642
      %v810 = vmul.f32 %v791, %v643
      %v811 = vmul.f32 %v782, %v642
      %v812 = vmul.f32 %v792, %v643
      %v813 = vperm.slane %v644, 0
      %v814 = vmul.f32 %v732, %v813
      %v815 = vmul.f32 %v733, %v813
      %v816 = vmul.f32 %v734, %v813
      %v817 = vmul.f32 %v735, %v813
      %v818 = vmul.f32 %v736, %v813
      %v819 = vmul.f32 %v737, %v813
      %v820 = vmul.f32 %v738, %v813
      %v821 = vmul.f32 %v739, %v813
      %v822 = vmul.f32 %v740, %v813
      %v823 = vmul.f32 %v741, %v813
      %v824 = vmul.f32 %v742, %v813
      %v825 = vmul.f32 %v743, %v813
      %v826 = vmul.f32 %v744, %v813
      %v827 = vmul.f32 %v745, %v813
      %v828 = vmul.f32 %v746, %v813
      %v829 = vmul.f32 %v747, %v813
      %v830 = vperm.slane %v644, 1
      %v831 = vmul.f32 %v671, %v830
      %v832 = vmul.f32 %v672, %v830
      %v833 = vmul.f32 %v673, %v830
      %v834 = vmul.f32 %v674, %v830
      %v835 = vmul.f32 %v675, %v830
      %v836 = vmul.f32 %v676, %v830
      %v837 = vmul.f32 %v677, %v830
      %v838 = vmul.f32 %v678, %v830
      %v839 = vmul.f32 %v679, %v830
      %v840 = vmul.f32 %v680, %v830
      %v841 = vmul.f32 %v681, %v830
      %v842 = vmul.f32 %v682, %v830
      %v843 = vmul.f32 %v683, %v830
      %v844 = vmul.f32 %v684, %v830
      %v845 = vmul.f32 %v685, %v830
      %v846 = vmul.f32 %v686, %v830
      %v847 = vadd.f32 %v814, %v831
      %v848 = vadd.f32 %v815, %v832
      %v849 = vadd.f32 %v816, %v833
      %v850 = vadd.f32 %v817, %v834
      %v851 = vadd.f32 %v818, %v835
      %v852 = vadd.f32 %v819, %v836
      %v853 = vadd.f32 %v820, %v837
      %v854 = vadd.f32 %v821, %v838
      %v855 = vadd.f32 %v822, %v839
      %v856 = vadd.f32 %v823, %v840
      %v857 = vadd.f32 %v824, %v841
      %v858 = vadd.f32 %v825, %v842
      %v859 = vadd.f32 %v826, %v843
      %v860 = vadd.f32 %v827, %v844
      %v861 = vadd.f32 %v828, %v845
      %v862 = vadd.f32 %v829, %v846
      %v863 = vperm.slane %v644, 2
      %v864 = vmul.f32 %v793, %v863
      %v865 = vmul.f32 %v794, %v863
      %v866 = vmul.f32 %v795, %v863
      %v867 = vmul.f32 %v796, %v863
      %v868 = vmul.f32 %v797, %v863
      %v869 = vmul.f32 %v798, %v863
      %v870 = vmul.f32 %v799, %v863
      %v871 = vmul.f32 %v800, %v863
      %v872 = vmul.f32 %v801, %v863
      %v873 = vmul.f32 %v802, %v863
      %v874 = vmul.f32 %v803, %v863
      %v875 = vmul.f32 %v804, %v863
      %v876 = vmul.f32 %v805, %v863
      %v877 = vmul.f32 %v806, %v863
      %v878 = vmul.f32 %v807, %v863
      %v879 = vmul.f32 %v808, %v863
      %v880 = vadd.f32 %v847, %v864
      %v881 = vadd.f32 %v848, %v865
      %v882 = vadd.f32 %v849, %v866
      %v883 = vadd.f32 %v850, %v867
      %v884 = vadd.f32 %v851, %v868
      %v885 = vadd.f32 %v852, %v869
      %v886 = vadd.f32 %v853, %v870
      %v887 = vadd.f32 %v854, %v871
      %v888 = vadd.f32 %v855, %v872
      %v889 = vadd.f32 %v856, %v873
      %v890 = vadd.f32 %v857, %v874
      %v891 = vadd.f32 %v858, %v875
      %v892 = vadd.f32 %v859, %v876
      %v893 = vadd.f32 %v860, %v877
      %v894 = vadd.f32 %v861, %v878
      %v895 = vadd.f32 %v862, %v879
      %v896 = vperm.slane %v644, 3
      %v897 = vmul.f32 %v734, %v896
      %v898 = vmul.f32 %v735, %v896
      %v899 = vmul.f32 %v736, %v896
      %v900 = vmul.f32 %v737, %v896
      %v901 = vmul.f32 %v738, %v896
      %v902 = vmul.f32 %v739, %v896
      %v903 = vmul.f32 %v740, %v896
      %v904 = vmul.f32 %v741, %v896
      %v905 = vmul.f32 %v742, %v896
      %v906 = vmul.f32 %v743, %v896
      %v907 = vmul.f32 %v744, %v896
      %v908 = vmul.f32 %v745, %v896
      %v909 = vmul.f32 %v746, %v896
      %v910 = vmul.f32 %v747, %v896
      %v911 = vmul.f32 %v748, %v896
      %v912 = vmul.f32 %v749, %v896
      %v913 = vadd.f32 %v880, %v897
      %v914 = vadd.f32 %v881, %v898
      %v915 = vadd.f32 %v882, %v899
      %v916 = vadd.f32 %v883, %v900
      %v917 = vadd.f32 %v884, %v901
      %v918 = vadd.f32 %v885, %v902
      %v919 = vadd.f32 %v886, %v903
      %v920 = vadd.f32 %v887, %v904
      %v921 = vadd.f32 %v888, %v905
      %v922 = vadd.f32 %v889, %v906
      %v923 = vadd.f32 %v890, %v907
      %v924 = vadd.f32 %v891, %v908
      %v925 = vadd.f32 %v892, %v909
      %v926 = vadd.f32 %v893, %v910
      %v927 = vadd.f32 %v894, %v911
      %v928 = vadd.f32 %v895, %v912
      %v929 = vperm.slane %v644, 4
      %v930 = vmul.f32 %v673, %v929
      %v931 = vmul.f32 %v674, %v929
      %v932 = vmul.f32 %v675, %v929
      %v933 = vmul.f32 %v676, %v929
      %v934 = vmul.f32 %v677, %v929
      %v935 = vmul.f32 %v678, %v929
      %v936 = vmul.f32 %v679, %v929
      %v937 = vmul.f32 %v680, %v929
      %v938 = vmul.f32 %v681, %v929
      %v939 = vmul.f32 %v682, %v929
      %v940 = vmul.f32 %v683, %v929
      %v941 = vmul.f32 %v684, %v929
      %v942 = vmul.f32 %v685, %v929
      %v943 = vmul.f32 %v686, %v929
      %v944 = vmul.f32 %v687, %v929
      %v945 = vmul.f32 %v688, %v929
      %v946 = vadd.f32 %v913, %v930
      %v947 = vadd.f32 %v914, %v931
      %v948 = vadd.f32 %v915, %v932
      %v949 = vadd.f32 %v916, %v933
      %v950 = vadd.f32 %v917, %v934
      %v951 = vadd.f32 %v918, %v935
      %v952 = vadd.f32 %v919, %v936
      %v953 = vadd.f32 %v920, %v937
      %v954 = vadd.f32 %v921, %v938
      %v955 = vadd.f32 %v922, %v939
      %v956 = vadd.f32 %v923, %v940
      %v957 = vadd.f32 %v924, %v941
      %v958 = vadd.f32 %v925, %v942
      %v959 = vadd.f32 %v926, %v943
      %v960 = vadd.f32 %v927, %v944
      %v961 = vadd.f32 %v928, %v945
      %v962 = vperm.slane %v644, 5
      %v963 = vmul.f32 %v795, %v962
      %v964 = vmul.f32 %v796, %v962
      %v965 = vmul.f32 %v797, %v962
      %v966 = vmul.f32 %v798, %v962
      %v967 = vmul.f32 %v799, %v962
      %v968 = vmul.f32 %v800, %v962
      %v969 = vmul.f32 %v801, %v962
      %v970 = vmul.f32 %v802, %v962
      %v971 = vmul.f32 %v803, %v962
      %v972 = vmul.f32 %v804, %v962
      %v973 = vmul.f32 %v805, %v962
      %v974 = vmul.f32 %v806, %v962
      %v975 = vmul.f32 %v807, %v962
      %v976 = vmul.f32 %v808, %v962
      %v977 = vmul.f32 %v809, %v962
      %v978 = vmul.f32 %v810, %v962
      %v979 = vadd.f32 %v946, %v963
      %v980 = vadd.f32 %v947, %v964
      %v981 = vadd.f32 %v948, %v965
      %v982 = vadd.f32 %v949, %v966
      %v983 = vadd.f32 %v950, %v967
      %v984 = vadd.f32 %v951, %v968
      %v985 = vadd.f32 %v952, %v969
      %v986 = vadd.f32 %v953, %v970
      %v987 = vadd.f32 %v954, %v971
      %v988 = vadd.f32 %v955, %v972
      %v989 = vadd.f32 %v956, %v973
      %v990 = vadd.f32 %v957, %v974
      %v991 = vadd.f32 %v958, %v975
      %v992 = vadd.f32 %v959, %v976
      %v993 = vadd.f32 %v960, %v977
      %v994 = vadd.f32 %v961, %v978
      %v995 = vperm.slane %v644, 6
      %v996 = vmul.f32 %v736, %v995
      %v997 = vmul.f32 %v737, %v995
      %v998 = vmul.f32 %v738, %v995
      %v999 = vmul.f32 %v739, %v995
      %v1000 = vmul.f32 %v740, %v995
      %v1001 = vmul.f32 %v741, %v995
      %v1002 = vmul.f32 %v742, %v995
      %v1003 = vmul.f32 %v743, %v995
      %v1004 = vmul.f32 %v744, %v995
      %v1005 = vmul.f32 %v745, %v995
      %v1006 = vmul.f32 %v746, %v995
      %v1007 = vmul.f32 %v747, %v995
      %v1008 = vmul.f32 %v748, %v995
      %v1009 = vmul.f32 %v749, %v995
      %v1010 = vmul.f32 %v750, %v995
      %v1011 = vmul.f32 %v751, %v995
      %v1012 = vadd.f32 %v979, %v996
      %v1013 = vadd.f32 %v980, %v997
      %v1014 = vadd.f32 %v981, %v998
      %v1015 = vadd.f32 %v982, %v999
      %v1016 = vadd.f32 %v983, %v1000
      %v1017 = vadd.f32 %v984, %v1001
      %v1018 = vadd.f32 %v985, %v1002
      %v1019 = vadd.f32 %v986, %v1003
      %v1020 = vadd.f32 %v987, %v1004
      %v1021 = vadd.f32 %v988, %v1005
      %v1022 = vadd.f32 %v989, %v1006
      %v1023 = vadd.f32 %v990, %v1007
      %v1024 = vadd.f32 %v991, %v1008
      %v1025 = vadd.f32 %v992, %v1009
      %v1026 = vadd.f32 %v993, %v1010
      %v1027 = vadd.f32 %v994, %v1011
      %v1028 = vperm.slane %v644, 7
      %v1029 = vmul.f32 %v675, %v1028
      %v1030 = vmul.f32 %v676, %v1028
      %v1031 = vmul.f32 %v677, %v1028
      %v1032 = vmul.f32 %v678, %v1028
      %v1033 = vmul.f32 %v679, %v1028
      %v1034 = vmul.f32 %v680, %v1028
      %v1035 = vmul.f32 %v681, %v1028
      %v1036 = vmul.f32 %v682, %v1028
      %v1037 = vmul.f32 %v683, %v1028
      %v1038 = vmul.f32 %v684, %v1028
      %v1039 = vmul.f32 %v685, %v1028
      %v1040 = vmul.f32 %v686, %v1028
      %v1041 = vmul.f32 %v687, %v1028
      %v1042 = vmul.f32 %v688, %v1028
      %v1043 = vmul.f32 %v689, %v1028
      %v1044 = vmul.f32 %v690, %v1028
      %v1045 = vadd.f32 %v1012, %v1029
      %v1046 = vadd.f32 %v1013, %v1030
      %v1047 = vadd.f32 %v1014, %v1031
      %v1048 = vadd.f32 %v1015, %v1032
      %v1049 = vadd.f32 %v1016, %v1033
      %v1050 = vadd.f32 %v1017, %v1034
      %v1051 = vadd.f32 %v1018, %v1035
      %v1052 = vadd.f32 %v1019, %v1036
      %v1053 = vadd.f32 %v1020, %v1037
      %v1054 = vadd.f32 %v1021, %v1038
      %v1055 = vadd.f32 %v1022, %v1039
      %v1056 = vadd.f32 %v1023, %v1040
      %v1057 = vadd.f32 %v1024, %v1041
      %v1058 = vadd.f32 %v1025, %v1042
      %v1059 = vadd.f32 %v1026, %v1043
      %v1060 = vadd.f32 %v1027, %v1044
      %v1061 = vperm.slane %v645, 0
      %v1062 = vmul.f32 %v797, %v1061
      %v1063 = vmul.f32 %v798, %v1061
      %v1064 = vmul.f32 %v799, %v1061
      %v1065 = vmul.f32 %v800, %v1061
      %v1066 = vmul.f32 %v801, %v1061
      %v1067 = vmul.f32 %v802, %v1061
      %v1068 = vmul.f32 %v803, %v1061
      %v1069 = vmul.f32 %v804, %v1061
      %v1070 = vmul.f32 %v805, %v1061
      %v1071 = vmul.f32 %v806, %v1061
      %v1072 = vmul.f32 %v807, %v1061
      %v1073 = vmul.f32 %v808, %v1061
      %v1074 = vmul.f32 %v809, %v1061
      %v1075 = vmul.f32 %v810, %v1061
      %v1076 = vmul.f32 %v811, %v1061
      %v1077 = vmul.f32 %v812, %v1061
      %v1078 = vadd.f32 %v1045, %v1062
      %v1079 = vadd.f32 %v1046, %v1063
      %v1080 = vadd.f32 %v1047, %v1064
      %v1081 = vadd.f32 %v1048, %v1065
      %v1082 = vadd.f32 %v1049, %v1066
      %v1083 = vadd.f32 %v1050, %v1067
      %v1084 = vadd.f32 %v1051, %v1068
      %v1085 = vadd.f32 %v1052, %v1069
      %v1086 = vadd.f32 %v1053, %v1070
      %v1087 = vadd.f32 %v1054, %v1071
      %v1088 = vadd.f32 %v1055, %v1072
      %v1089 = vadd.f32 %v1056, %v1073
      %v1090 = vadd.f32 %v1057, %v1074
      %v1091 = vadd.f32 %v1058, %v1075
      %v1092 = vadd.f32 %v1059, %v1076
      %v1093 = vadd.f32 %v1060, %v1077
      %v1095 = vperm.slane %v646, 0
      %v1097 = vadd.f32 %v1078, %v1095
      %v1098 = vadd.f32 %v1079, %v1095
      %v1099 = vadd.f32 %v1080, %v1095
      %v1100 = vadd.f32 %v1081, %v1095
      %v1101 = vadd.f32 %v1082, %v1095
      %v1102 = vadd.f32 %v1083, %v1095
      %v1103 = vadd.f32 %v1084, %v1095
      %v1104 = vadd.f32 %v1085, %v1095
      %v1105 = vadd.f32 %v1086, %v1095
      %v1106 = vadd.f32 %v1087, %v1095
      %v1107 = vadd.f32 %v1088, %v1095
      %v1108 = vadd.f32 %v1089, %v1095
      %v1109 = vadd.f32 %v1090, %v1095
      %v1110 = vadd.f32 %v1091, %v1095
      %v1111 = vadd.f32 %v1092, %v1095
      %v1112 = vadd.f32 %v1093, %v1095
      %v1113 = vmax.f32 %v1097, 0.0
      %v1114 = vmax.f32 %v1098, 0.0
      %v1115 = vmax.f32 %v1099, 0.0
      %v1116 = vmax.f32 %v1100, 0.0
      %v1117 = vmax.f32 %v1101, 0.0
      %v1118 = vmax.f32 %v1102, 0.0
      %v1119 = vmax.f32 %v1103, 0.0
      %v1120 = vmax.f32 %v1104, 0.0
      %v1121 = vmax.f32 %v1105, 0.0
      %v1122 = vmax.f32 %v1106, 0.0
      %v1123 = vmax.f32 %v1107, 0.0
      %v1124 = vmax.f32 %v1108, 0.0
      %v1125 = vmax.f32 %v1109, 0.0
      %v1126 = vmax.f32 %v1110, 0.0
      %v1127 = vmax.f32 %v1111, 0.0
      %v1128 = vmax.f32 %v1112, 0.0
      %v1129 = vmin.f32 %v1113, 6.0
      %v1130 = vmin.f32 %v1114, 6.0
      %v1131 = vmin.f32 %v1115, 6.0
      %v1132 = vmin.f32 %v1116, 6.0
      %v1133 = vmin.f32 %v1117, 6.0
      %v1134 = vmin.f32 %v1118, 6.0
      %v1135 = vmin.f32 %v1119, 6.0
      %v1136 = vmin.f32 %v1120, 6.0
      %v1137 = vmin.f32 %v1121, 6.0
      %v1138 = vmin.f32 %v1122, 6.0
      %v1139 = vmin.f32 %v1123, 6.0
      %v1140 = vmin.f32 %v1124, 6.0
      %v1141 = vmin.f32 %v1125, 6.0
      %v1142 = vmin.f32 %v1126, 6.0
      %v1143 = vmin.f32 %v1127, 6.0
      %v1144 = vmin.f32 %v1128, 6.0
      %v1145 = vpack.c.bf16 %v1130, %v1129
      %v1146 = vpack.c.bf16 %v1132, %v1131
      %v1147 = vpack.c.bf16 %v1134, %v1133
      %v1148 = vpack.c.bf16 %v1136, %v1135
      %v1149 = vpack.c.bf16 %v1138, %v1137
      %v1150 = vpack.c.bf16 %v1140, %v1139
      %v1151 = vpack.c.bf16 %v1142, %v1141
      %v1152 = vpack.c.bf16 %v1144, %v1143
      %v1154 = vperm.slane %v647, 0
      %v1159 = vunpack.c.l.b16 %v648
      %v1160 = vunpack.c.l.b16 %v649
      %v1161 = vunpack.c.l.b16 %v650
      %v1162 = vpack.c.b16 %v1160, %v1159
      %v1163 = vpack.c.b16 %v1161, %v1161
      %vm1165 = vcmask 195584
      %v1167 = vsel %vm1165, %v1145, 0
      %v1170 = vsel %vm1165, %v1146, 0
      %v1173 = vsel %vm1165, %v1147, 0
      %v1176 = vsel %vm1165, %v1148, 0
      %v1179 = vsel %vm1165, %v1149, 0
      %v1182 = vsel %vm1165, %v1150, 0
      %v1185 = vsel %vm1165, %v1151, 0
      %v1188 = vsel %vm1165, %v1152, 0
      %vm1190 = vcmask 1043456
      %v1192 = vsel %vm1190, %v1163, 0
      %1194 = vmatpush.bf16.msra.mxu0 0
      %1195 = vmatpush.bf16.msra.mxu0 0
      %1196 = vmatpush.bf16.msra.mxu0 0
      %1197 = vmatpush.bf16.msra.mxu0 0
      %1198 = vmatpush.bf16.msra.mxu0 0
      %1199 = vmatpush.bf16.msra.mxu0 0
      %1200 = vmatpush.bf16.msra.mxu0 %v1192
      %1201 = vmatpush.bf16.msra.mxu0 %v1162
      %1202 = vmatmul.bf16.gmra.mxu0 %v1167
      %v1203 = vpop.f32.mrf.mxu0
      %v1204 = vadd.f32 %v1154, %v1203
      %v1205 = vpop.f32.mrf.mxu0
      %v1206 = vadd.f32 %v1154, %v1205
      %1207 = vmatmul.bf16.gmra.mxu0 %v1170
      %v1208 = vpop.f32.mrf.mxu0
      %v1209 = vadd.f32 %v1154, %v1208
      %v1210 = vpop.f32.mrf.mxu0
      %v1211 = vadd.f32 %v1154, %v1210
      %1212 = vmatmul.bf16.gmra.mxu0 %v1173
      %v1213 = vpop.f32.mrf.mxu0
      %v1214 = vadd.f32 %v1154, %v1213
      %v1215 = vpop.f32.mrf.mxu0
      %v1216 = vadd.f32 %v1154, %v1215
      %1217 = vmatmul.bf16.gmra.mxu0 %v1176
      %v1218 = vpop.f32.mrf.mxu0
      %v1219 = vadd.f32 %v1154, %v1218
      %v1220 = vpop.f32.mrf.mxu0
      %v1221 = vadd.f32 %v1154, %v1220
      %1222 = vmatmul.bf16.gmra.mxu0 %v1179
      %v1223 = vpop.f32.mrf.mxu0
      %v1224 = vadd.f32 %v1154, %v1223
      %v1225 = vpop.f32.mrf.mxu0
      %v1226 = vadd.f32 %v1154, %v1225
      %1227 = vmatmul.bf16.gmra.mxu0 %v1182
      %v1228 = vpop.f32.mrf.mxu0
      %v1229 = vadd.f32 %v1154, %v1228
      %v1230 = vpop.f32.mrf.mxu0
      %v1231 = vadd.f32 %v1154, %v1230
      %1232 = vmatmul.bf16.gmra.mxu0 %v1185
      %v1233 = vpop.f32.mrf.mxu0
      %v1234 = vadd.f32 %v1154, %v1233
      %v1235 = vpop.f32.mrf.mxu0
      %v1236 = vadd.f32 %v1154, %v1235
      %1237 = vmatmul.bf16.gmra.mxu0 %v1188
      %v1238 = vpop.f32.mrf.mxu0
      %v1239 = vadd.f32 %v1154, %v1238
      %v1240 = vpop.f32.mrf.mxu0
      %v1241 = vadd.f32 %v1154, %v1240
      %1242 = vdwg.mxu0
      %v1243 = vld [vmem:[%s273] sm:$0xff]
      %v1244 = vld [vmem:[%s273 + $0x8] sm:$0xff]
      %v1245 = vld [vmem:[%s273 + $0x10] sm:$0xff]
      %v1246 = vld [vmem:[%s273 + $0x18] sm:$0xff]
      %v1247 = vld [vmem:[%s273 + $0x20] sm:$0xff]
      %v1248 = vld [vmem:[%s273 + $0x28] sm:$0xff]
      %v1249 = vld [vmem:[%s273 + $0x30] sm:$0xff]
      %v1250 = vld [vmem:[%s273 + $0x38] sm:$0xff]
      %v1251 = vld [vmem:[%s273 + $0x40] sm:$0xff]
      %v1252 = vld [vmem:[%s273 + $0x48] sm:$0xff]
      %v1253 = vld [vmem:[%s273 + $0x50] sm:$0xff]
      %v1254 = vld [vmem:[%s273 + $0x58] sm:$0xff]
      %v1255 = vld [vmem:[%s273 + $0x60] sm:$0xff]
      %v1256 = vld [vmem:[%s273 + $0x68] sm:$0xff]
      %v1257 = vld [vmem:[%s273 + $0x70] sm:$0xff]
      %v1258 = vld [vmem:[%s273 + $0x78] sm:$0xff]
      %v1259 = vadd.f32 %v1204, %v1243
      %v1260 = vadd.f32 %v1206, %v1244
      %v1261 = vadd.f32 %v1209, %v1245
      %v1262 = vadd.f32 %v1211, %v1246
      %v1263 = vadd.f32 %v1214, %v1247
      %v1264 = vadd.f32 %v1216, %v1248
      %v1265 = vadd.f32 %v1219, %v1249
      %v1266 = vadd.f32 %v1221, %v1250
      %v1267 = vadd.f32 %v1224, %v1251
      %v1268 = vadd.f32 %v1226, %v1252
      %v1269 = vadd.f32 %v1229, %v1253
      %v1270 = vadd.f32 %v1231, %v1254
      %v1271 = vadd.f32 %v1234, %v1255
      %v1272 = vadd.f32 %v1236, %v1256
      %v1273 = vadd.f32 %v1239, %v1257
      %v1274 = vadd.f32 %v1241, %v1258
      %1275 = vst.msk [vmem:[%s278] sm:$0xff] %vm315, %v1259
      %1276 = vst.msk [vmem:[%s278 + $0x8] sm:$0xff] %vm315, %v1260
      %1277 = vst.msk [vmem:[%s278 + $0x10] sm:$0xff] %vm315, %v1261
      %1278 = vst.msk [vmem:[%s278 + $0x18] sm:$0xff] %vm315, %v1262
      %1279 = vst.msk [vmem:[%s278 + $0x20] sm:$0xff] %vm315, %v1263
      %1280 = vst.msk [vmem:[%s278 + $0x28] sm:$0xff] %vm315, %v1264
      %1281 = vst.msk [vmem:[%s278 + $0x30] sm:$0xff] %vm315, %v1265
      %1282 = vst.msk [vmem:[%s278 + $0x38] sm:$0xff] %vm315, %v1266
      %1283 = vst.msk [vmem:[%s278 + $0x40] sm:$0xff] %vm315, %v1267
      %1284 = vst.msk [vmem:[%s278 + $0x48] sm:$0xff] %vm315, %v1268
      %1285 = vst.msk [vmem:[%s278 + $0x50] sm:$0xff] %vm315, %v1269
      %1286 = vst.msk [vmem:[%s278 + $0x58] sm:$0xff] %vm315, %v1270
      %1287 = vst.msk [vmem:[%s278 + $0x60] sm:$0xff] %vm315, %v1271
      %1288 = vst.msk [vmem:[%s278 + $0x68] sm:$0xff] %vm315, %v1272
      %1289 = vst.msk [vmem:[%s278 + $0x70] sm:$0xff] %vm315, %v1273
      %1290 = vst.msk [vmem:[%s278 + $0x78] sm:$0xff] %vm315, %v1274
      %s1291 = scalar_lea.vmem [#allocation2], 64
      %v1292 = vld [vmem:[%s1291] sm:$0xf]
      %v1293 = vld [vmem:[%s1291 + $0x4] sm:$0xf]
      %v1294 = vld [vmem:[%s1291 + $0x8] sm:$0xf]
      %v1295 = vld [vmem:[%s1291 + $0xc] sm:$0xf]
      %v1296 = vld [vmem:[%s1291 + $0x10] sm:$0xf]
      %v1297 = vld [vmem:[%s1291 + $0x14] sm:$0xf]
      %v1298 = vld [vmem:[%s1291 + $0x18] sm:$0xf]
      %v1299 = vld [vmem:[%s1291 + $0x1c] sm:$0xf]
      %v1300 = vld [vmem:[%s1291 + $0x20] sm:$0xf]
      %v1301 = vld [vmem:[%s1291 + $0x24] sm:$0xf]
      %v1302 = vld [vmem:[%s1291 + $0x28] sm:$0xf]
      %v1303 = vld [vmem:[%s1291 + $0x2c] sm:$0xf]
      %v1304 = vld [vmem:[%s1291 + $0x30] sm:$0xf]
      %v1305 = vld [vmem:[%s1291 + $0x34] sm:$0xf]
      %v1306 = vld [vmem:[%s1291 + $0x38] sm:$0xf]
      %v1307 = vld [vmem:[%s1291 + $0x3c] sm:$0xf]
      %v1308 = vld [vmem:[%s1291 + $0x40] sm:$0xf]
      %v1309 = vld [vmem:[%s1291 + $0x44] sm:$0xf]
      %v1310 = vld [vmem:[%s1291 + $0x48] sm:$0xf]
      %v1311 = vld [vmem:[%s1291 + $0x4c] sm:$0xf]
      %v1312 = vunpack.c.l.bf16 %v1292
      %v1313 = vunpack.c.l.bf16 %v1293
      %v1314 = vunpack.c.l.bf16 %v1294
      %v1315 = vunpack.c.l.bf16 %v1295
      %v1316 = vunpack.c.l.bf16 %v1296
      %v1317 = vunpack.c.l.bf16 %v1297
      %v1318 = vunpack.c.l.bf16 %v1298
      %v1319 = vunpack.c.l.bf16 %v1299
      %v1320 = vunpack.c.l.bf16 %v1300
      %v1321 = vunpack.c.l.bf16 %v1301
      %v1322 = vunpack.c.l.bf16 %v1302
      %v1323 = vunpack.c.l.bf16 %v1303
      %v1324 = vunpack.c.l.bf16 %v1304
      %v1325 = vunpack.c.l.bf16 %v1305
      %v1326 = vunpack.c.l.bf16 %v1306
      %v1327 = vunpack.c.l.bf16 %v1307
      %v1328 = vunpack.c.l.bf16 %v1308
      %v1329 = vunpack.c.l.bf16 %v1309
      %v1330 = vunpack.c.l.bf16 %v1310
      %v1331 = vunpack.c.l.bf16 %v1311
      %v1332 = vrot.slane %v1312, 7
      %v1333 = vrot.slane %v1314, 7
      %v1334 = vrot.slane %v1316, 7
      %v1335 = vrot.slane %v1318, 7
      %v1336 = vrot.slane %v1320, 7
      %v1337 = vrot.slane %v1322, 7
      %v1338 = vrot.slane %v1324, 7
      %v1339 = vrot.slane %v1326, 7
      %v1340 = vrot.slane %v1328, 7
      %v1341 = vrot.slane %v1330, 7
      %v1342 = vrot.slane %v1313, 7
      %v1343 = vrot.slane %v1315, 7
      %v1344 = vrot.slane %v1317, 7
      %v1345 = vrot.slane %v1319, 7
      %v1346 = vrot.slane %v1321, 7
      %v1347 = vrot.slane %v1323, 7
      %v1348 = vrot.slane %v1325, 7
      %v1349 = vrot.slane %v1327, 7
      %v1350 = vrot.slane %v1329, 7
      %v1351 = vrot.slane %v1331, 7
      %v1352 = vsel %vm711, %v1332, %v1342
      %v1353 = vsel %vm711, %v1333, %v1343
      %v1354 = vsel %vm711, %v1334, %v1344
      %v1355 = vsel %vm711, %v1335, %v1345
      %v1356 = vsel %vm711, %v1336, %v1346
      %v1357 = vsel %vm711, %v1337, %v1347
      %v1358 = vsel %vm711, %v1338, %v1348
      %v1359 = vsel %vm711, %v1339, %v1349
      %v1360 = vsel %vm711, %v1340, %v1350
      %v1361 = vsel %vm711, %v1341, %v1351
      %v1362 = vsel %vm711, %v1342, %v1332
      %v1363 = vsel %vm711, %v1343, %v1333
      %v1364 = vsel %vm711, %v1344, %v1334
      %v1365 = vsel %vm711, %v1345, %v1335
      %v1366 = vsel %vm711, %v1346, %v1336
      %v1367 = vsel %vm711, %v1347, %v1337
      %v1368 = vsel %vm711, %v1348, %v1338
      %v1369 = vsel %vm711, %v1349, %v1339
      %v1370 = vsel %vm711, %v1350, %v1340
      %v1371 = vsel %vm711, %v1351, %v1341
      %v1372 = vmul.f32 %v1362, %v636
      %v1373 = vmul.f32 %v1352, %v637
      %v1374 = vmul.f32 %v1363, %v636
      %v1375 = vmul.f32 %v1353, %v637
      %v1376 = vmul.f32 %v1364, %v636
      %v1377 = vmul.f32 %v1354, %v637
      %v1378 = vmul.f32 %v1365, %v636
      %v1379 = vmul.f32 %v1355, %v637
      %v1380 = vmul.f32 %v1366, %v636
      %v1381 = vmul.f32 %v1356, %v637
      %v1382 = vmul.f32 %v1367, %v636
      %v1383 = vmul.f32 %v1357, %v637
      %v1384 = vmul.f32 %v1368, %v636
      %v1385 = vmul.f32 %v1358, %v637
      %v1386 = vmul.f32 %v1369, %v636
      %v1387 = vmul.f32 %v1359, %v637
      %v1388 = vmul.f32 %v1370, %v636
      %v1389 = vmul.f32 %v1360, %v637
      %v1390 = vmul.f32 %v1371, %v636
      %v1391 = vmul.f32 %v1361, %v637
      %v1392 = vrot.slane %v1312, 1
      %v1393 = vrot.slane %v1314, 1
      %v1394 = vrot.slane %v1316, 1
      %v1395 = vrot.slane %v1318, 1
      %v1396 = vrot.slane %v1320, 1
      %v1397 = vrot.slane %v1322, 1
      %v1398 = vrot.slane %v1324, 1
      %v1399 = vrot.slane %v1326, 1
      %v1400 = vrot.slane %v1328, 1
      %v1401 = vrot.slane %v1330, 1
      %v1402 = vrot.slane %v1313, 1
      %v1403 = vrot.slane %v1315, 1
      %v1404 = vrot.slane %v1317, 1
      %v1405 = vrot.slane %v1319, 1
      %v1406 = vrot.slane %v1321, 1
      %v1407 = vrot.slane %v1323, 1
      %v1408 = vrot.slane %v1325, 1
      %v1409 = vrot.slane %v1327, 1
      %v1410 = vrot.slane %v1329, 1
      %v1411 = vrot.slane %v1331, 1
      %v1412 = vsel %vm772, %v1392, %v1402
      %v1413 = vsel %vm772, %v1393, %v1403
      %v1414 = vsel %vm772, %v1394, %v1404
      %v1415 = vsel %vm772, %v1395, %v1405
      %v1416 = vsel %vm772, %v1396, %v1406
      %v1417 = vsel %vm772, %v1397, %v1407
      %v1418 = vsel %vm772, %v1398, %v1408
      %v1419 = vsel %vm772, %v1399, %v1409
      %v1420 = vsel %vm772, %v1400, %v1410
      %v1421 = vsel %vm772, %v1401, %v1411
      %v1422 = vsel %vm772, %v1402, %v1392
      %v1423 = vsel %vm772, %v1403, %v1393
      %v1424 = vsel %vm772, %v1404, %v1394
      %v1425 = vsel %vm772, %v1405, %v1395
      %v1426 = vsel %vm772, %v1406, %v1396
      %v1427 = vsel %vm772, %v1407, %v1397
      %v1428 = vsel %vm772, %v1408, %v1398
      %v1429 = vsel %vm772, %v1409, %v1399
      %v1430 = vsel %vm772, %v1410, %v1400
      %v1431 = vsel %vm772, %v1411, %v1401
      %v1432 = vmul.f32 %v1412, %v642
      %v1433 = vmul.f32 %v1422, %v643
      %v1434 = vmul.f32 %v1413, %v642
      %v1435 = vmul.f32 %v1423, %v643
      %v1436 = vmul.f32 %v1414, %v642
      %v1437 = vmul.f32 %v1424, %v643
      %v1438 = vmul.f32 %v1415, %v642
      %v1439 = vmul.f32 %v1425, %v643
      %v1440 = vmul.f32 %v1416, %v642
      %v1441 = vmul.f32 %v1426, %v643
      %v1442 = vmul.f32 %v1417, %v642
      %v1443 = vmul.f32 %v1427, %v643
      %v1444 = vmul.f32 %v1418, %v642
      %v1445 = vmul.f32 %v1428, %v643
      %v1446 = vmul.f32 %v1419, %v642
      %v1447 = vmul.f32 %v1429, %v643
      %v1448 = vmul.f32 %v1420, %v642
      %v1449 = vmul.f32 %v1430, %v643
      %v1450 = vmul.f32 %v1421, %v642
      %v1451 = vmul.f32 %v1431, %v643
      %v1452 = vmul.f32 %v1372, %v813
      %v1453 = vmul.f32 %v1373, %v813
      %v1454 = vmul.f32 %v1374, %v813
      %v1455 = vmul.f32 %v1375, %v813
      %v1456 = vmul.f32 %v1376, %v813
      %v1457 = vmul.f32 %v1377, %v813
      %v1458 = vmul.f32 %v1378, %v813
      %v1459 = vmul.f32 %v1379, %v813
      %v1460 = vmul.f32 %v1380, %v813
      %v1461 = vmul.f32 %v1381, %v813
      %v1462 = vmul.f32 %v1382, %v813
      %v1463 = vmul.f32 %v1383, %v813
      %v1464 = vmul.f32 %v1384, %v813
      %v1465 = vmul.f32 %v1385, %v813
      %v1466 = vmul.f32 %v1386, %v813
      %v1467 = vmul.f32 %v1387, %v813
      %v1468 = vmul.f32 %v1312, %v830
      %v1469 = vmul.f32 %v1313, %v830
      %v1470 = vmul.f32 %v1314, %v830
      %v1471 = vmul.f32 %v1315, %v830
      %v1472 = vmul.f32 %v1316, %v830
      %v1473 = vmul.f32 %v1317, %v830
      %v1474 = vmul.f32 %v1318, %v830
      %v1475 = vmul.f32 %v1319, %v830
      %v1476 = vmul.f32 %v1320, %v830
      %v1477 = vmul.f32 %v1321, %v830
      %v1478 = vmul.f32 %v1322, %v830
      %v1479 = vmul.f32 %v1323, %v830
      %v1480 = vmul.f32 %v1324, %v830
      %v1481 = vmul.f32 %v1325, %v830
      %v1482 = vmul.f32 %v1326, %v830
      %v1483 = vmul.f32 %v1327, %v830
      %v1484 = vadd.f32 %v1452, %v1468
      %v1485 = vadd.f32 %v1453, %v1469
      %v1486 = vadd.f32 %v1454, %v1470
      %v1487 = vadd.f32 %v1455, %v1471
      %v1488 = vadd.f32 %v1456, %v1472
      %v1489 = vadd.f32 %v1457, %v1473
      %v1490 = vadd.f32 %v1458, %v1474
      %v1491 = vadd.f32 %v1459, %v1475
      %v1492 = vadd.f32 %v1460, %v1476
      %v1493 = vadd.f32 %v1461, %v1477
      %v1494 = vadd.f32 %v1462, %v1478
      %v1495 = vadd.f32 %v1463, %v1479
      %v1496 = vadd.f32 %v1464, %v1480
      %v1497 = vadd.f32 %v1465, %v1481
      %v1498 = vadd.f32 %v1466, %v1482
      %v1499 = vadd.f32 %v1467, %v1483
      %v1500 = vmul.f32 %v1432, %v863
      %v1501 = vmul.f32 %v1433, %v863
      %v1502 = vmul.f32 %v1434, %v863
      %v1503 = vmul.f32 %v1435, %v863
      %v1504 = vmul.f32 %v1436, %v863
      %v1505 = vmul.f32 %v1437, %v863
      %v1506 = vmul.f32 %v1438, %v863
      %v1507 = vmul.f32 %v1439, %v863
      %v1508 = vmul.f32 %v1440, %v863
      %v1509 = vmul.f32 %v1441, %v863
      %v1510 = vmul.f32 %v1442, %v863
      %v1511 = vmul.f32 %v1443, %v863
      %v1512 = vmul.f32 %v1444, %v863
      %v1513 = vmul.f32 %v1445, %v863
      %v1514 = vmul.f32 %v1446, %v863
      %v1515 = vmul.f32 %v1447, %v863
      %v1516 = vadd.f32 %v1484, %v1500
      %v1517 = vadd.f32 %v1485, %v1501
      %v1518 = vadd.f32 %v1486, %v1502
      %v1519 = vadd.f32 %v1487, %v1503
      %v1520 = vadd.f32 %v1488, %v1504
      %v1521 = vadd.f32 %v1489, %v1505
      %v1522 = vadd.f32 %v1490, %v1506
      %v1523 = vadd.f32 %v1491, %v1507
      %v1524 = vadd.f32 %v1492, %v1508
      %v1525 = vadd.f32 %v1493, %v1509
      %v1526 = vadd.f32 %v1494, %v1510
      %v1527 = vadd.f32 %v1495, %v1511
      %v1528 = vadd.f32 %v1496, %v1512
      %v1529 = vadd.f32 %v1497, %v1513
      %v1530 = vadd.f32 %v1498, %v1514
      %v1531 = vadd.f32 %v1499, %v1515
      %v1532 = vmul.f32 %v1374, %v896
      %v1533 = vmul.f32 %v1375, %v896
      %v1534 = vmul.f32 %v1376, %v896
      %v1535 = vmul.f32 %v1377, %v896
      %v1536 = vmul.f32 %v1378, %v896
      %v1537 = vmul.f32 %v1379, %v896
      %v1538 = vmul.f32 %v1380, %v896
      %v1539 = vmul.f32 %v1381, %v896
      %v1540 = vmul.f32 %v1382, %v896
      %v1541 = vmul.f32 %v1383, %v896
      %v1542 = vmul.f32 %v1384, %v896
      %v1543 = vmul.f32 %v1385, %v896
      %v1544 = vmul.f32 %v1386, %v896
      %v1545 = vmul.f32 %v1387, %v896
      %v1546 = vmul.f32 %v1388, %v896
      %v1547 = vmul.f32 %v1389, %v896
      %v1548 = vadd.f32 %v1516, %v1532
      %v1549 = vadd.f32 %v1517, %v1533
      %v1550 = vadd.f32 %v1518, %v1534
      %v1551 = vadd.f32 %v1519, %v1535
      %v1552 = vadd.f32 %v1520, %v1536
      %v1553 = vadd.f32 %v1521, %v1537
      %v1554 = vadd.f32 %v1522, %v1538
      %v1555 = vadd.f32 %v1523, %v1539
      %v1556 = vadd.f32 %v1524, %v1540
      %v1557 = vadd.f32 %v1525, %v1541
      %v1558 = vadd.f32 %v1526, %v1542
      %v1559 = vadd.f32 %v1527, %v1543
      %v1560 = vadd.f32 %v1528, %v1544
      %v1561 = vadd.f32 %v1529, %v1545
      %v1562 = vadd.f32 %v1530, %v1546
      %v1563 = vadd.f32 %v1531, %v1547
      %v1564 = vmul.f32 %v1314, %v929
      %v1565 = vmul.f32 %v1315, %v929
      %v1566 = vmul.f32 %v1316, %v929
      %v1567 = vmul.f32 %v1317, %v929
      %v1568 = vmul.f32 %v1318, %v929
      %v1569 = vmul.f32 %v1319, %v929
      %v1570 = vmul.f32 %v1320, %v929
      %v1571 = vmul.f32 %v1321, %v929
      %v1572 = vmul.f32 %v1322, %v929
      %v1573 = vmul.f32 %v1323, %v929
      %v1574 = vmul.f32 %v1324, %v929
      %v1575 = vmul.f32 %v1325, %v929
      %v1576 = vmul.f32 %v1326, %v929
      %v1577 = vmul.f32 %v1327, %v929
      %v1578 = vmul.f32 %v1328, %v929
      %v1579 = vmul.f32 %v1329, %v929
      %v1580 = vadd.f32 %v1548, %v1564
      %v1581 = vadd.f32 %v1549, %v1565
      %v1582 = vadd.f32 %v1550, %v1566
      %v1583 = vadd.f32 %v1551, %v1567
      %v1584 = vadd.f32 %v1552, %v1568
      %v1585 = vadd.f32 %v1553, %v1569
      %v1586 = vadd.f32 %v1554, %v1570
      %v1587 = vadd.f32 %v1555, %v1571
      %v1588 = vadd.f32 %v1556, %v1572
      %v1589 = vadd.f32 %v1557, %v1573
      %v1590 = vadd.f32 %v1558, %v1574
      %v1591 = vadd.f32 %v1559, %v1575
      %v1592 = vadd.f32 %v1560, %v1576
      %v1593 = vadd.f32 %v1561, %v1577
      %v1594 = vadd.f32 %v1562, %v1578
      %v1595 = vadd.f32 %v1563, %v1579
      %v1596 = vmul.f32 %v1434, %v962
      %v1597 = vmul.f32 %v1435, %v962
      %v1598 = vmul.f32 %v1436, %v962
      %v1599 = vmul.f32 %v1437, %v962
      %v1600 = vmul.f32 %v1438, %v962
      %v1601 = vmul.f32 %v1439, %v962
      %v1602 = vmul.f32 %v1440, %v962
      %v1603 = vmul.f32 %v1441, %v962
      %v1604 = vmul.f32 %v1442, %v962
      %v1605 = vmul.f32 %v1443, %v962
      %v1606 = vmul.f32 %v1444, %v962
      %v1607 = vmul.f32 %v1445, %v962
      %v1608 = vmul.f32 %v1446, %v962
      %v1609 = vmul.f32 %v1447, %v962
      %v1610 = vmul.f32 %v1448, %v962
      %v1611 = vmul.f32 %v1449, %v962
      %v1612 = vadd.f32 %v1580, %v1596
      %v1613 = vadd.f32 %v1581, %v1597
      %v1614 = vadd.f32 %v1582, %v1598
      %v1615 = vadd.f32 %v1583, %v1599
      %v1616 = vadd.f32 %v1584, %v1600
      %v1617 = vadd.f32 %v1585, %v1601
      %v1618 = vadd.f32 %v1586, %v1602
      %v1619 = vadd.f32 %v1587, %v1603
      %v1620 = vadd.f32 %v1588, %v1604
      %v1621 = vadd.f32 %v1589, %v1605
      %v1622 = vadd.f32 %v1590, %v1606
      %v1623 = vadd.f32 %v1591, %v1607
      %v1624 = vadd.f32 %v1592, %v1608
      %v1625 = vadd.f32 %v1593, %v1609
      %v1626 = vadd.f32 %v1594, %v1610
      %v1627 = vadd.f32 %v1595, %v1611
      %v1628 = vmul.f32 %v1376, %v995
      %v1629 = vmul.f32 %v1377, %v995
      %v1630 = vmul.f32 %v1378, %v995
      %v1631 = vmul.f32 %v1379, %v995
      %v1632 = vmul.f32 %v1380, %v995
      %v1633 = vmul.f32 %v1381, %v995
      %v1634 = vmul.f32 %v1382, %v995
      %v1635 = vmul.f32 %v1383, %v995
      %v1636 = vmul.f32 %v1384, %v995
      %v1637 = vmul.f32 %v1385, %v995
      %v1638 = vmul.f32 %v1386, %v995
      %v1639 = vmul.f32 %v1387, %v995
      %v1640 = vmul.f32 %v1388, %v995
      %v1641 = vmul.f32 %v1389, %v995
      %v1642 = vmul.f32 %v1390, %v995
      %v1643 = vmul.f32 %v1391, %v995
      %v1644 = vadd.f32 %v1612, %v1628
      %v1645 = vadd.f32 %v1613, %v1629
      %v1646 = vadd.f32 %v1614, %v1630
      %v1647 = vadd.f32 %v1615, %v1631
      %v1648 = vadd.f32 %v1616, %v1632
      %v1649 = vadd.f32 %v1617, %v1633
      %v1650 = vadd.f32 %v1618, %v1634
      %v1651 = vadd.f32 %v1619, %v1635
      %v1652 = vadd.f32 %v1620, %v1636
      %v1653 = vadd.f32 %v1621, %v1637
      %v1654 = vadd.f32 %v1622, %v1638
      %v1655 = vadd.f32 %v1623, %v1639
      %v1656 = vadd.f32 %v1624, %v1640
      %v1657 = vadd.f32 %v1625, %v1641
      %v1658 = vadd.f32 %v1626, %v1642
      %v1659 = vadd.f32 %v1627, %v1643
      %v1660 = vmul.f32 %v1316, %v1028
      %v1661 = vmul.f32 %v1317, %v1028
      %v1662 = vmul.f32 %v1318, %v1028
      %v1663 = vmul.f32 %v1319, %v1028
      %v1664 = vmul.f32 %v1320, %v1028
      %v1665 = vmul.f32 %v1321, %v1028
      %v1666 = vmul.f32 %v1322, %v1028
      %v1667 = vmul.f32 %v1323, %v1028
      %v1668 = vmul.f32 %v1324, %v1028
      %v1669 = vmul.f32 %v1325, %v1028
      %v1670 = vmul.f32 %v1326, %v1028
      %v1671 = vmul.f32 %v1327, %v1028
      %v1672 = vmul.f32 %v1328, %v1028
      %v1673 = vmul.f32 %v1329, %v1028
      %v1674 = vmul.f32 %v1330, %v1028
      %v1675 = vmul.f32 %v1331, %v1028
      %v1676 = vadd.f32 %v1644, %v1660
      %v1677 = vadd.f32 %v1645, %v1661
      %v1678 = vadd.f32 %v1646, %v1662
      %v1679 = vadd.f32 %v1647, %v1663
      %v1680 = vadd.f32 %v1648, %v1664
      %v1681 = vadd.f32 %v1649, %v1665
      %v1682 = vadd.f32 %v1650, %v1666
      %v1683 = vadd.f32 %v1651, %v1667
      %v1684 = vadd.f32 %v1652, %v1668
      %v1685 = vadd.f32 %v1653, %v1669
      %v1686 = vadd.f32 %v1654, %v1670
      %v1687 = vadd.f32 %v1655, %v1671
      %v1688 = vadd.f32 %v1656, %v1672
      %v1689 = vadd.f32 %v1657, %v1673
      %v1690 = vadd.f32 %v1658, %v1674
      %v1691 = vadd.f32 %v1659, %v1675
      %v1692 = vmul.f32 %v1436, %v1061
      %v1693 = vmul.f32 %v1437, %v1061
      %v1694 = vmul.f32 %v1438, %v1061
      %v1695 = vmul.f32 %v1439, %v1061
      %v1696 = vmul.f32 %v1440, %v1061
      %v1697 = vmul.f32 %v1441, %v1061
      %v1698 = vmul.f32 %v1442, %v1061
      %v1699 = vmul.f32 %v1443, %v1061
      %v1700 = vmul.f32 %v1444, %v1061
      %v1701 = vmul.f32 %v1445, %v1061
      %v1702 = vmul.f32 %v1446, %v1061
      %v1703 = vmul.f32 %v1447, %v1061
      %v1704 = vmul.f32 %v1448, %v1061
      %v1705 = vmul.f32 %v1449, %v1061
      %v1706 = vmul.f32 %v1450, %v1061
      %v1707 = vmul.f32 %v1451, %v1061
      %v1708 = vadd.f32 %v1676, %v1692
      %v1709 = vadd.f32 %v1677, %v1693
      %v1710 = vadd.f32 %v1678, %v1694
      %v1711 = vadd.f32 %v1679, %v1695
      %v1712 = vadd.f32 %v1680, %v1696
      %v1713 = vadd.f32 %v1681, %v1697
      %v1714 = vadd.f32 %v1682, %v1698
      %v1715 = vadd.f32 %v1683, %v1699
      %v1716 = vadd.f32 %v1684, %v1700
      %v1717 = vadd.f32 %v1685, %v1701
      %v1718 = vadd.f32 %v1686, %v1702
      %v1719 = vadd.f32 %v1687, %v1703
      %v1720 = vadd.f32 %v1688, %v1704
      %v1721 = vadd.f32 %v1689, %v1705
      %v1722 = vadd.f32 %v1690, %v1706
      %v1723 = vadd.f32 %v1691, %v1707
      %v1724 = vadd.f32 %v1708, %v1095
      %v1725 = vadd.f32 %v1709, %v1095
      %v1726 = vadd.f32 %v1710, %v1095
      %v1727 = vadd.f32 %v1711, %v1095
      %v1728 = vadd.f32 %v1712, %v1095
      %v1729 = vadd.f32 %v1713, %v1095
      %v1730 = vadd.f32 %v1714, %v1095
      %v1731 = vadd.f32 %v1715, %v1095
      %v1732 = vadd.f32 %v1716, %v1095
      %v1733 = vadd.f32 %v1717, %v1095
      %v1734 = vadd.f32 %v1718, %v1095
      %v1735 = vadd.f32 %v1719, %v1095
      %v1736 = vadd.f32 %v1720, %v1095
      %v1737 = vadd.f32 %v1721, %v1095
      %v1738 = vadd.f32 %v1722, %v1095
      %v1739 = vadd.f32 %v1723, %v1095
      %v1740 = vmax.f32 %v1724, 0.0
      %v1741 = vmax.f32 %v1725, 0.0
      %v1742 = vmax.f32 %v1726, 0.0
      %v1743 = vmax.f32 %v1727, 0.0
      %v1744 = vmax.f32 %v1728, 0.0
      %v1745 = vmax.f32 %v1729, 0.0
      %v1746 = vmax.f32 %v1730, 0.0
      %v1747 = vmax.f32 %v1731, 0.0
      %v1748 = vmax.f32 %v1732, 0.0
      %v1749 = vmax.f32 %v1733, 0.0
      %v1750 = vmax.f32 %v1734, 0.0
      %v1751 = vmax.f32 %v1735, 0.0
      %v1752 = vmax.f32 %v1736, 0.0
      %v1753 = vmax.f32 %v1737, 0.0
      %v1754 = vmax.f32 %v1738, 0.0
      %v1755 = vmax.f32 %v1739, 0.0
      %v1756 = vmin.f32 %v1740, 6.0
      %v1757 = vmin.f32 %v1741, 6.0
      %v1758 = vmin.f32 %v1742, 6.0
      %v1759 = vmin.f32 %v1743, 6.0
      %v1760 = vmin.f32 %v1744, 6.0
      %v1761 = vmin.f32 %v1745, 6.0
      %v1762 = vmin.f32 %v1746, 6.0
      %v1763 = vmin.f32 %v1747, 6.0
      %v1764 = vmin.f32 %v1748, 6.0
      %v1765 = vmin.f32 %v1749, 6.0
      %v1766 = vmin.f32 %v1750, 6.0
      %v1767 = vmin.f32 %v1751, 6.0
      %v1768 = vmin.f32 %v1752, 6.0
      %v1769 = vmin.f32 %v1753, 6.0
      %v1770 = vmin.f32 %v1754, 6.0
      %v1771 = vmin.f32 %v1755, 6.0
      %v1772 = vpack.c.bf16 %v1757, %v1756
      %v1773 = vpack.c.bf16 %v1759, %v1758
      %v1774 = vpack.c.bf16 %v1761, %v1760
      %v1775 = vpack.c.bf16 %v1763, %v1762
      %v1776 = vpack.c.bf16 %v1765, %v1764
      %v1777 = vpack.c.bf16 %v1767, %v1766
      %v1778 = vpack.c.bf16 %v1769, %v1768
      %v1779 = vpack.c.bf16 %v1771, %v1770
      %v1781 = vsel %vm1165, %v1772, 0
      %v1784 = vsel %vm1165, %v1773, 0
      %v1787 = vsel %vm1165, %v1774, 0
      %v1790 = vsel %vm1165, %v1775, 0
      %v1793 = vsel %vm1165, %v1776, 0
      %v1796 = vsel %vm1165, %v1777, 0
      %v1799 = vsel %vm1165, %v1778, 0
      %v1802 = vsel %vm1165, %v1779, 0
      %1804 = vmatpush.bf16.msra.mxu0 0
      %1805 = vmatpush.bf16.msra.mxu0 0
      %1806 = vmatpush.bf16.msra.mxu0 0
      %1807 = vmatpush.bf16.msra.mxu0 0
      %1808 = vmatpush.bf16.msra.mxu0 0
      %1809 = vmatpush.bf16.msra.mxu0 0
      %1810 = vmatpush.bf16.msra.mxu0 %v1192
      %1811 = vmatpush.bf16.msra.mxu0 %v1162
      %1812 = vmatmul.bf16.gmra.mxu0 %v1781
      %v1813 = vpop.f32.mrf.mxu0
      %v1814 = vadd.f32 %v1154, %v1813
      %v1815 = vpop.f32.mrf.mxu0
      %v1816 = vadd.f32 %v1154, %v1815
      %1817 = vmatmul.bf16.gmra.mxu0 %v1784
      %v1818 = vpop.f32.mrf.mxu0
      %v1819 = vadd.f32 %v1154, %v1818
      %v1820 = vpop.f32.mrf.mxu0
      %v1821 = vadd.f32 %v1154, %v1820
      %1822 = vmatmul.bf16.gmra.mxu0 %v1787
      %v1823 = vpop.f32.mrf.mxu0
      %v1824 = vadd.f32 %v1154, %v1823
      %v1825 = vpop.f32.mrf.mxu0
      %v1826 = vadd.f32 %v1154, %v1825
      %1827 = vmatmul.bf16.gmra.mxu0 %v1790
      %v1828 = vpop.f32.mrf.mxu0
      %v1829 = vadd.f32 %v1154, %v1828
      %v1830 = vpop.f32.mrf.mxu0
      %v1831 = vadd.f32 %v1154, %v1830
      %1832 = vmatmul.bf16.gmra.mxu0 %v1793
      %v1833 = vpop.f32.mrf.mxu0
      %v1834 = vadd.f32 %v1154, %v1833
      %v1835 = vpop.f32.mrf.mxu0
      %v1836 = vadd.f32 %v1154, %v1835
      %1837 = vmatmul.bf16.gmra.mxu0 %v1796
      %v1838 = vpop.f32.mrf.mxu0
      %v1839 = vadd.f32 %v1154, %v1838
      %v1840 = vpop.f32.mrf.mxu0
      %v1841 = vadd.f32 %v1154, %v1840
      %1842 = vmatmul.bf16.gmra.mxu0 %v1799
      %v1843 = vpop.f32.mrf.mxu0
      %v1844 = vadd.f32 %v1154, %v1843
      %v1845 = vpop.f32.mrf.mxu0
      %v1846 = vadd.f32 %v1154, %v1845
      %1847 = vmatmul.bf16.gmra.mxu0 %v1802
      %v1848 = vpop.f32.mrf.mxu0
      %v1849 = vadd.f32 %v1154, %v1848
      %v1850 = vpop.f32.mrf.mxu0
      %v1851 = vadd.f32 %v1154, %v1850
      %1852 = vdwg.mxu0
      %v1853 = vld [vmem:[%s458] sm:$0xff]
      %v1854 = vld [vmem:[%s458 + $0x8] sm:$0xff]
      %v1855 = vld [vmem:[%s458 + $0x10] sm:$0xff]
      %v1856 = vld [vmem:[%s458 + $0x18] sm:$0xff]
      %v1857 = vld [vmem:[%s458 + $0x20] sm:$0xff]
      %v1858 = vld [vmem:[%s458 + $0x28] sm:$0xff]
      %v1859 = vld [vmem:[%s458 + $0x30] sm:$0xff]
      %v1860 = vld [vmem:[%s458 + $0x38] sm:$0xff]
      %v1861 = vld [vmem:[%s458 + $0x40] sm:$0xff]
      %v1862 = vld [vmem:[%s458 + $0x48] sm:$0xff]
      %v1863 = vld [vmem:[%s458 + $0x50] sm:$0xff]
      %v1864 = vld [vmem:[%s458 + $0x58] sm:$0xff]
      %v1865 = vld [vmem:[%s458 + $0x60] sm:$0xff]
      %v1866 = vld [vmem:[%s458 + $0x68] sm:$0xff]
      %v1867 = vld [vmem:[%s458 + $0x70] sm:$0xff]
      %v1868 = vld [vmem:[%s458 + $0x78] sm:$0xff]
      %v1869 = vadd.f32 %v1814, %v1853
      %v1870 = vadd.f32 %v1816, %v1854
      %v1871 = vadd.f32 %v1819, %v1855
      %v1872 = vadd.f32 %v1821, %v1856
      %v1873 = vadd.f32 %v1824, %v1857
      %v1874 = vadd.f32 %v1826, %v1858
      %v1875 = vadd.f32 %v1829, %v1859
      %v1876 = vadd.f32 %v1831, %v1860
      %v1877 = vadd.f32 %v1834, %v1861
      %v1878 = vadd.f32 %v1836, %v1862
      %v1879 = vadd.f32 %v1839, %v1863
      %v1880 = vadd.f32 %v1841, %v1864
      %v1881 = vadd.f32 %v1844, %v1865
      %v1882 = vadd.f32 %v1846, %v1866
      %v1883 = vadd.f32 %v1849, %v1867
      %v1884 = vadd.f32 %v1851, %v1868
      %s1885 = scalar_lea.vmem %s278, 128
      %1886 = vst.msk [vmem:[%s1885] sm:$0xff] %vm315, %v1869
      %1887 = vst.msk [vmem:[%s1885 + $0x8] sm:$0xff] %vm315, %v1870
      %1888 = vst.msk [vmem:[%s1885 + $0x10] sm:$0xff] %vm315, %v1871
      %1889 = vst.msk [vmem:[%s1885 + $0x18] sm:$0xff] %vm315, %v1872
      %1890 = vst.msk [vmem:[%s1885 + $0x20] sm:$0xff] %vm315, %v1873
      %1891 = vst.msk [vmem:[%s1885 + $0x28] sm:$0xff] %vm315, %v1874
      %1892 = vst.msk [vmem:[%s1885 + $0x30] sm:$0xff] %vm315, %v1875
      %1893 = vst.msk [vmem:[%s1885 + $0x38] sm:$0xff] %vm315, %v1876
      %1894 = vst.msk [vmem:[%s1885 + $0x40] sm:$0xff] %vm315, %v1877
      %1895 = vst.msk [vmem:[%s1885 + $0x48] sm:$0xff] %vm315, %v1878
      %1896 = vst.msk [vmem:[%s1885 + $0x50] sm:$0xff] %vm315, %v1879
      %1897 = vst.msk [vmem:[%s1885 + $0x58] sm:$0xff] %vm315, %v1880
      %1898 = vst.msk [vmem:[%s1885 + $0x60] sm:$0xff] %vm315, %v1881
      %1899 = vst.msk [vmem:[%s1885 + $0x68] sm:$0xff] %vm315, %v1882
      %1900 = vst.msk [vmem:[%s1885 + $0x70] sm:$0xff] %vm315, %v1883
      %1901 = vst.msk [vmem:[%s1885 + $0x78] sm:$0xff] %vm315, %v1884
      %p1902 = scmp.lt.s32.totalorder %s18, 1
      %s1903 = scalar_select %p1902, %s18, 1
      %s1904 = smul.addr %s1903, 32
      %s1905 = smul.addr %s1904, 8
      %s1906 = scalar_lea.vmem %s7, %s1905
      // Predicated region
      $region49: #{tpu_custom_call.1} parent=47 // pred_check
        %p1907 = pneg %p188
      $region50: #{tpu_custom_call.1} parent=47 // pred_check_branch
        %1909 = sbr.rel (%p1907) target = $region52
      $region51: #{tpu_custom_call.1} parent=47 // pred_region
        _
      $region52: #{tpu_custom_call.1} parent=47 // pred_fallthru
        _
    $region48: #{tpu_custom_call.1} parent=5 // pred_fallthru
      _
    %p1910 = scmp.le.s32.totalorder 2, %s13
    // Predicated region
    $region53: #{tpu_custom_call.1} parent=5 // pred_check
      %p1911 = pneg %p1910
    $region54: #{tpu_custom_call.1} parent=5 // pred_check_branch
      %1913 = sbr.rel (%p1911) target = $region56
    $region55: #{tpu_custom_call.1} parent=5 // pred_region
      %s1914 = ssub.s32 %s13, 2
      // Predicated region
      $region57: #{tpu_custom_call.1} parent=55 // pred_check
        %p1915 = pneg %p194
      $region58: #{tpu_custom_call.1} parent=55 // pred_check_branch
        %1917 = sbr.rel (%p1915) target = $region60
      $region59: #{tpu_custom_call.1} parent=55 // pred_region
        %p1918 = scmp.lt.s32.totalorder %s19, 1
        %s1919 = scalar_select %p1918, %s19, 1
        %s1920 = smul.addr %s1919, 32
        %s1921 = smul.addr %s1920, 8
        %s1922 = scalar_lea.vmem %s7, %s1921
      $region60: #{tpu_custom_call.1} parent=55 // pred_fallthru
        _
    $region56: #{tpu_custom_call.1} parent=5 // pred_fallthru
      _
  $region6: #{tpu_custom_call.1} parent=0 // loop_footer
    %s17 = sadd.s32 1, %s13
  $region7: #{tpu_custom_call.1} parent=0 // loop_footer_branch
    %12 = sbr.rel target = $region3
  $region8: #{tpu_custom_call.1} parent=0 // loop_exit
    _

</llo_original>
